<compile_context>
chip_gen: v7x
topology: tpu7x:2x2x1
jax: 0.10.0
libtpu: 0.0.40
codegen_flags: <defaults>
</compile_context>

<pallas_src>
import numpy as np
import jax
import jax.numpy as jnp
from jax import lax
from jax.experimental import pallas as pl
from jax.experimental.pallas import tpu as pltpu

_S = 128  # pixels per lane group (output lane width)


def _seg_kernel(x_ref, sel_ref, b_ref, o_ref):
    """One row-tile per grid step.

    x_ref:   VMEM (TG, S*C) f32 — TG groups of S pixels, channels interleaved (NHWC order)
    sel_ref: VMEM (S*C, S)  f32 — weight-folded compaction matrix: sel[i,j] = w[i%C]*(i//C==j)
    b_ref:   SMEM (1,)      f32 — bias (decision threshold is -bias)
    o_ref:   VMEM (TG, S)   f32 — binary mask tile
    """
    # clamp(0, 1) — mirrors `image.clamp(0.0, 1.0)` in the torch forward (VPU).
    x = jnp.clip(x_ref[...], 0.0, 1.0)                        # (TG, S*C)
    # Stride-C lane compaction + per-channel weighting in one f32 matmul on the
    # otherwise-idle MXU (fully hidden under the HBM-bound DMA); f32 accumulate,
    # HIGHEST precision so no bf16 rounding near the decision boundary.
    logits = jnp.dot(x, sel_ref[...],
                     preferred_element_type=jnp.float32,
                     precision=lax.Precision.HIGHEST)         # (TG, S)
    # logits + bias > 0  <=>  logits > -bias  (scalar compare saves a VPU pass;
    # logits == -bias -> mask off, same strict '>' semantics as before).
    o_ref[...] = (logits > -b_ref[0]).astype(o_ref.dtype)


def _device_tuning():
    """(max_block_bytes, min_grid_steps) per TPU generation."""
    kind = ""
    try:
        kind = jax.devices()[0].device_kind.lower()
    except Exception:
        pass
    if "v7" in kind:
        # 2 TCs/chip: bigger blocks (HBM BW is higher so per-step overhead costs
        # more), but keep >= 8 grid steps so both TensorCores get balanced work.
        return 8 * 1024 * 1024, 8
    if "v6" in kind:
        return 8 * 1024 * 1024, 4
    # v5e and unknown: 2*(4 + 4/3) MiB double-buffered stays inside the 16 MiB
    # default scoped VMEM with room for the matmul temporaries.
    return 4 * 1024 * 1024, 4


def _pick_tg(rows, row_bytes, max_block_bytes, min_steps):
    """Row-tile height: a multiple of 8 (sublane tile) capped by the VMEM block
    budget, shrunk so the grid has >= min_steps steps when there is enough work."""
    if rows <= 8:
        return rows                                   # full-extent block
    cap = max(8, (max_block_bytes // row_bytes) // 8 * 8)
    tg = min(cap, (rows // 8) * 8)
    if rows >= 8 * min_steps:
        balanced = max(8, (pl.cdiv(rows, min_steps) // 8) * 8)
        tg = min(tg, balanced)
    return tg


def lang_sam_text_segmentor_forward(images_nhwc, weight, bias):
    """images_nhwc: (B, H, W, C) float32 (NHWC, as the torch forward receives).
    Returns (B, H, W) float32 binary masks."""
    B, H, W, C = images_nhwc.shape
    S = _S
    P = H * W
    # Pad the flattened pixel axis up to a multiple of S so every block keeps an
    # unmasked 128-lane output store; padded rows are sliced off afterwards.
    P_pad = pl.cdiv(P, S) * S
    x = images_nhwc.astype(jnp.float32).reshape(B, P, C)
    if P_pad != P:
        # TODO(synk): one extra HBM copy, only taken when H*W % 128 != 0.
        x = jnp.pad(x, ((0, 0), (0, P_pad - P), (0, 0)))
    G = P_pad // S
    rows = B * G

    # FREE reshape (memory order preserved) — no NHWC->NCHW transpose traffic.
    # Each row is S consecutive pixels with their C channels interleaved along
    # lanes exactly as they sit in memory.
    x = x.reshape(rows, S * C)

    # Weight-folded compaction matrix and scalar bias.  Constant index_maps, so
    # they are DMA'd into VMEM/SMEM once and stay resident across grid steps.
    idx = jnp.arange(S * C)
    sel = jnp.where(idx[:, None] // C == jnp.arange(S)[None, :],
                    weight.astype(jnp.float32)[idx % C][:, None],
                    0.0).astype(jnp.float32)                  # (S*C, S)
    bias = bias.astype(jnp.float32).reshape(1)

    max_block_bytes, min_steps = _device_tuning()
    tg = _pick_tg(rows, S * C * 4, max_block_bytes, min_steps)
    steps = pl.cdiv(rows, tg)

    out = pl.pallas_call(
        _seg_kernel,
        out_shape=jax.ShapeDtypeStruct((rows, S), jnp.float32),
        grid=(steps,),
        in_specs=[
            pl.BlockSpec((tg, S * C), lambda i: (i, 0)),
            pl.BlockSpec((S * C, S), lambda i: (0, 0)),
            pl.BlockSpec(memory_space=pltpu.MemorySpace.SMEM),
        ],
        out_specs=pl.BlockSpec((tg, S), lambda i: (i, 0)),
        compiler_params=pltpu.CompilerParams(
            # Single independent axis -> v7x shards it across its 2 TCs.
            dimension_semantics=("parallel",),
        ),
        # HBM-bound hint for XLA's scheduler.
        cost_estimate=pl.CostEstimate(
            flops=2 * rows * S * C,
            transcendentals=0,
            bytes_accessed=rows * S * C * 4 + rows * S * 4 + S * C * S * 4,
        ),
    )(x, sel, bias)

    # Free reshape / slice back to the (B, H, W) contract of the torch forward.
    return out.reshape(B, G * S)[:, :P].reshape(B, H, W)


if __name__ == "__main__":
    # Small shapes consistent with the forward: batch=2, RGB 16x16 images.
    B, H, W, C = 2, 16, 16, 3

    key = jax.random.PRNGKey(0)
    # Slightly outside [0, 1] so the in-kernel clamp is exercised.
    images = jax.random.uniform(key, (B, H, W, C), dtype=jnp.float32,
                                minval=-0.1, maxval=1.1)

    # Deterministic synthetic "head" parameters (luma-style channel weights).
    weight = jnp.asarray(np.array([0.299, 0.587, 0.114], dtype=np.float32))
    bias = jnp.asarray(np.array([-0.5], dtype=np.float32))

    masks = lang_sam_text_segmentor_forward(images, weight, bias)
    masks = jax.block_until_ready(masks)

    assert masks.shape == (B, H, W), masks.shape
    assert masks.dtype == jnp.float32, masks.dtype

    def _ref(imgs, w, b):
        imgs64 = np.asarray(imgs, dtype=np.float64)
        logits = np.einsum("bhwc,c->bhw", np.clip(imgs64, 0.0, 1.0),
                           np.asarray(w, dtype=np.float64)) + float(b[0])
        return (logits > 0.0).astype(np.float32), logits

    ref_mask, ref_logits = _ref(images, weight, bias)
    masks_np = np.asarray(masks)
    assert np.isin(masks_np, (0.0, 1.0)).all(), "mask must be binary"
    # f32 HIGHEST-precision matmul vs f64 reference: only exclude pixels within
    # f32 rounding of the decision boundary (much tighter than the old bf16 band).
    stable = np.abs(ref_logits) > 1e-4
    assert stable.mean() > 0.9, "degenerate test: too many boundary pixels"
    np.testing.assert_array_equal(masks_np[stable], ref_mask[stable])

    # Also exercise the padded path (H*W not a multiple of 128).
    imgs2 = jax.random.uniform(jax.random.PRNGKey(0), (2, 10, 10, 3),
                               dtype=jnp.float32, minval=-0.1, maxval=1.1)
    m2 = jax.block_until_ready(lang_sam_text_segmentor_forward(imgs2, weight, bias))
    r2, l2 = _ref(imgs2, weight, bias)
    m2_np = np.asarray(m2)
    assert m2_np.shape == (2, 10, 10) and np.isin(m2_np, (0.0, 1.0)).all()
    s2 = np.abs(l2) > 1e-4
    np.testing.assert_array_equal(m2_np[s2], r2[s2])

    print("KERNEL_OK")
</pallas_src>

<mosaic_0001>
module attributes {stable_mosaic.version = 11 : i64} {
  func.func @_seg_kernel(%arg0: i32, %arg1: memref<4x384xf32, #tpu.memory_space<vmem>>, %arg2: memref<384x128xf32, #tpu.memory_space<vmem>>, %arg3: memref<1xf32, #tpu.memory_space<smem>>, %arg4: memref<4x128xf32, #tpu.memory_space<vmem>>) attributes {dimension_semantics = [#tpu.dimension_semantics<parallel>], iteration_bounds = array<i64: 1>, scalar_prefetch = 0 : i64, scratch_operands = 0 : i64, tpu.core_type = #tpu.core_type<tc>, window_params = [{transform_indices = @transform_0, window_bounds = array<i64: 4, 384>}, {pipeline_mode = #tpu.pipeline_mode<synchronous>, transform_indices = @transform_1, window_bounds = array<i64: 384, 128>}, {transform_indices = @transform_2, window_bounds = array<i64: 1>}, {transform_indices = @transform_3, window_bounds = array<i64: 4, 128>}]} {
    %c0 = arith.constant 0 : index
    %c0_0 = arith.constant 0 : index
    %0 = vector.load %arg1[%c0, %c0_0] : memref<4x384xf32, #tpu.memory_space<vmem>>, vector<4x384xf32>
    %cst = arith.constant 0.000000e+00 : f32
    %cst_1 = arith.constant 1.000000e+00 : f32
    %1 = vector.broadcast %cst : f32 to vector<4x384xf32>
    %2 = arith.maximumf %1, %0 : vector<4x384xf32>
    %3 = vector.broadcast %cst_1 : f32 to vector<4x384xf32>
    %4 = arith.minimumf %3, %2 : vector<4x384xf32>
    %c0_2 = arith.constant 0 : index
    %c0_3 = arith.constant 0 : index
    %5 = vector.load %arg2[%c0_2, %c0_3] : memref<384x128xf32, #tpu.memory_space<vmem>>, vector<384x128xf32>
    %cst_4 = arith.constant dense<0.000000e+00> : vector<4x128xf32>
    %6 = tpu.matmul %4, %5, %cst_4 {dimension_numbers = #tpu.dot_dimension_numbers<[1], [0], [0], [1], [0, 0, 1, 1], [], []>, precision = #tpu.contract_precision<fp32>} : vector<4x384xf32>, vector<384x128xf32>, vector<4x128xf32> -> vector<4x128xf32>
    %c0_5 = arith.constant 0 : index
    %7 = memref.load %arg3[%c0_5] : memref<1xf32, #tpu.memory_space<smem>>
    %cst_6 = arith.constant 0.000000e+00 : f32
    %8 = arith.subf %cst_6, %7 : f32
    %9 = vector.broadcast %8 : f32 to vector<4x128xf32>
    %10 = arith.cmpf ogt, %6, %9 : vector<4x128xf32>
    %11 = arith.extui %10 : vector<4x128xi1> to vector<4x128xi32>
    %12 = arith.sitofp %11 : vector<4x128xi32> to vector<4x128xf32>
    %c0_7 = arith.constant 0 : index
    %c0_8 = arith.constant 0 : index
    %13 = vector.load %arg4[%c0_7, %c0_8] : memref<4x128xf32, #tpu.memory_space<vmem>>, vector<4x128xf32>
    tpu.vector_store %arg4[%c0_7, %c0_8], %12 {strides = array<i32>} : memref<4x128xf32, #tpu.memory_space<vmem>>, vector<4x128xf32>,
    return
  }
  func.func @transform_0(%arg0: i32) -> (i32, i32) {
    %c0_i32 = arith.constant 0 : i32
    %c0_i32_0 = arith.constant 0 : i32
    return %arg0, %c0_i32 : i32, i32
  }
  func.func @transform_1(%arg0: i32) -> (i32, i32) {
    %c0_i32 = arith.constant 0 : i32
    %c0_i32_0 = arith.constant 0 : i32
    %c0_i32_1 = arith.constant 0 : i32
    return %c0_i32, %c0_i32_0 : i32, i32
  }
  func.func @transform_2(%arg0: i32) -> i32 {
    %c0_i32 = arith.constant 0 : i32
    %c0_i32_0 = arith.constant 0 : i32
    return %c0_i32 : i32
  }
  func.func @transform_3(%arg0: i32) -> (i32, i32) {
    %c0_i32 = arith.constant 0 : i32
    %c0_i32_0 = arith.constant 0 : i32
    return %arg0, %c0_i32 : i32, i32
  }
}

</mosaic_0001>

<llo_original>
// kernel: tpu_custom_call.1
$region0: #{tpu_custom_call.1}
  #allocation0 [shape = 'u32[]', space=smem, size = 0x4, offset = 0x4, fixed_abs, tag = 'smem constant byte address 0x4 - core index']
  #allocation1 [shape = 'u32[144,128]{1,0:T(1,128)}', space=vmem, size = 0x12000, scoped, tag = 'internal scratch']
  #allocation2 [shape = 'f32[1]{0:T(128)S(6)}', space=smem, size = 0x200, scoped, tag = 'scoped memory for tpu_custom_call.1']
  %s0 = inlined_call_operand.hbm [shape: f32[4,384], index: 0, kind: input, shape index: {}]
  %s1 = inlined_call_operand.hbm [shape: f32[384,128], index: 1, kind: input, shape index: {}]
  %s2 = inlined_call_operand.<no memory space> [shape: f32[1], index: 2, kind: input, shape index: {}]
  %s3 = inlined_call_operand.hbm [shape: f32[4,128], index: 3, kind: output, shape index: {}]
  %s4 = sld [smem:[#allocation0]]
  $region30: #{tpu_custom_call.1} parent=0
    _
  %s6 = ssub.s32 1, %s4
  %s7 = scalar_select 0, %s6, %s4
  %8 = sst [smem:[#allocation2]] %s2
  $region1: #{tpu_custom_call.1} parent=0
    #allocation3 [shape = 'u8[6144]{0}', space=vmem, size = 0x1800, scoped, tag = 'input window, operand 0, single buffered']
    #allocation4 [shape = 's32[1]{0}', space=sflag, size = 0x4, scoped, tag = 'scoped memory for tpu_custom_call.1']
    #allocation5 [shape = 's32[1]{0}', space=sflag, size = 0x4, scoped, tag = 'scoped memory for tpu_custom_call.1']
    #allocation6 [shape = 'u8[196608]{0}', space=vmem, size = 0x30000, scoped, tag = 'input window, operand 1, single buffered']
    #allocation7 [shape = 's32[1]{0}', space=sflag, size = 0x4, scoped, tag = 'scoped memory for tpu_custom_call.1']
    #allocation8 [shape = 'u8[2048]{0}', space=vmem, size = 0x800, scoped, tag = 'output window, operand 0, single buffered']
    %9 = vsyncpa [#allocation4], 0
    %10 = vsyncpa [#allocation7], 0
    %11 = vsyncpa [#allocation5], 0
    // Predicated region
    $region2: #{tpu_custom_call.1} parent=1 // pred_check
      _
    $region3: #{tpu_custom_call.1} parent=1 // pred_check_branch
      %13 = sbr.rel (0) target = $region5
    $region4: #{tpu_custom_call.1} parent=1 // pred_region
      %s15 = ssub.s32 192, 192
      %16 = vsyncadd [#allocation4], %s15
      %s18 = sshll.u32 [#allocation3], 4
      %s19 = int_to_ptr.vmem [resolvable:$true] %s18
      %21 = dma.hbm_to_vmem [thread:$0]  %s0, 192, %s19, [#allocation4]
    $region5: #{tpu_custom_call.1} parent=1 // pred_fallthru
      _
    // Predicated region
    $region6: #{tpu_custom_call.1} parent=1 // pred_check
      _
    $region7: #{tpu_custom_call.1} parent=1 // pred_check_branch
      %23 = sbr.rel (0) target = $region9
    $region8: #{tpu_custom_call.1} parent=1 // pred_region
      %s25 = ssub.s32 6144, 6144
      %26 = vsyncadd [#allocation7], %s25
      %s27 = sshll.u32 [#allocation6], 4
      %s28 = int_to_ptr.vmem [resolvable:$true] %s27
      %33 = dma.hbm_to_vmem [thread:$0]  %s1, 6144, %s28, [#allocation7], 128, 128, 8
    $region9: #{tpu_custom_call.1} parent=1 // pred_fallthru
      _
    // Predicated region
    $region10: #{tpu_custom_call.1} parent=1 // pred_check
      _
    $region11: #{tpu_custom_call.1} parent=1 // pred_check_branch
      %35 = sbr.rel (0) target = $region13
    $region12: #{tpu_custom_call.1} parent=1 // pred_region
      _
    $region13: #{tpu_custom_call.1} parent=1 // pred_fallthru
      _
    // Predicated region
    $region14: #{tpu_custom_call.1} parent=1 // pred_check
      _
    $region15: #{tpu_custom_call.1} parent=1 // pred_check_branch
      %37 = sbr.rel (0) target = $region17
    $region16: #{tpu_custom_call.1} parent=1 // pred_region
      %38 = dma.done [#allocation4], 192
    $region17: #{tpu_custom_call.1} parent=1 // pred_fallthru
      _
    // Predicated region
    $region18: #{tpu_custom_call.1} parent=1 // pred_check
      _
    $region19: #{tpu_custom_call.1} parent=1 // pred_check_branch
      %40 = sbr.rel (0) target = $region21
    $region20: #{tpu_custom_call.1} parent=1 // pred_region
      %41 = dma.done [#allocation7], 6144
    $region21: #{tpu_custom_call.1} parent=1 // pred_fallthru
      _
    %v42 = vld [vmem:[#allocation3] sm:$0xff]
    %v43 = vld [vmem:[#allocation3 + $0x8] sm:$0xf]
    %v44 = vmax.f32 %v42, 0.0
    %v45 = vmax.f32 %v43, 0.0
    %v46 = vmin.f32 %v44, 1.0
    %v47 = vmin.f32 %v45, 1.0
    %v48 = vld [vmem:[#allocation6] sm:$0xff]
    %v49 = vld [vmem:[#allocation6 + $0x8] sm:$0xff]
    %v50 = vld [vmem:[#allocation6 + $0x10] sm:$0xff]
    %v51 = vld [vmem:[#allocation6 + $0x18] sm:$0xff]
    %v52 = vld [vmem:[#allocation6 + $0x20] sm:$0xff]
    %v53 = vld [vmem:[#allocation6 + $0x28] sm:$0xff]
    %v54 = vld [vmem:[#allocation6 + $0x30] sm:$0xff]
    %v55 = vld [vmem:[#allocation6 + $0x38] sm:$0xff]
    %v56 = vld [vmem:[#allocation6 + $0x40] sm:$0xff]
    %v57 = vld [vmem:[#allocation6 + $0x48] sm:$0xff]
    %v58 = vld [vmem:[#allocation6 + $0x50] sm:$0xff]
    %v59 = vld [vmem:[#allocation6 + $0x58] sm:$0xff]
    %v60 = vld [vmem:[#allocation6 + $0x60] sm:$0xff]
    %v61 = vld [vmem:[#allocation6 + $0x68] sm:$0xff]
    %v62 = vld [vmem:[#allocation6 + $0x70] sm:$0xff]
    %v63 = vld [vmem:[#allocation6 + $0x78] sm:$0xff]
    %v64 = vld [vmem:[#allocation6 + $0x80] sm:$0xff]
    %v65 = vld [vmem:[#allocation6 + $0x88] sm:$0xff]
    %v66 = vld [vmem:[#allocation6 + $0x90] sm:$0xff]
    %v67 = vld [vmem:[#allocation6 + $0x98] sm:$0xff]
    %v68 = vld [vmem:[#allocation6 + $0xa0] sm:$0xff]
    %v69 = vld [vmem:[#allocation6 + $0xa8] sm:$0xff]
    %v70 = vld [vmem:[#allocation6 + $0xb0] sm:$0xff]
    %v71 = vld [vmem:[#allocation6 + $0xb8] sm:$0xff]
    %v72 = vld [vmem:[#allocation6 + $0xc0] sm:$0xff]
    %v73 = vld [vmem:[#allocation6 + $0xc8] sm:$0xff]
    %v74 = vld [vmem:[#allocation6 + $0xd0] sm:$0xff]
    %v75 = vld [vmem:[#allocation6 + $0xd8] sm:$0xff]
    %v76 = vld [vmem:[#allocation6 + $0xe0] sm:$0xff]
    %v77 = vld [vmem:[#allocation6 + $0xe8] sm:$0xff]
    %v78 = vld [vmem:[#allocation6 + $0xf0] sm:$0xff]
    %v79 = vld [vmem:[#allocation6 + $0xf8] sm:$0xff]
    %v80 = vld [vmem:[#allocation6 + $0x100] sm:$0xff]
    %v81 = vld [vmem:[#allocation6 + $0x108] sm:$0xff]
    %v82 = vld [vmem:[#allocation6 + $0x110] sm:$0xff]
    %v83 = vld [vmem:[#allocation6 + $0x118] sm:$0xff]
    %v84 = vld [vmem:[#allocation6 + $0x120] sm:$0xff]
    %v85 = vld [vmem:[#allocation6 + $0x128] sm:$0xff]
    %v86 = vld [vmem:[#allocation6 + $0x130] sm:$0xff]
    %v87 = vld [vmem:[#allocation6 + $0x138] sm:$0xff]
    %v88 = vld [vmem:[#allocation6 + $0x140] sm:$0xff]
    %v89 = vld [vmem:[#allocation6 + $0x148] sm:$0xff]
    %v90 = vld [vmem:[#allocation6 + $0x150] sm:$0xff]
    %v91 = vld [vmem:[#allocation6 + $0x158] sm:$0xff]
    %v92 = vld [vmem:[#allocation6 + $0x160] sm:$0xff]
    %v93 = vld [vmem:[#allocation6 + $0x168] sm:$0xff]
    %v94 = vld [vmem:[#allocation6 + $0x170] sm:$0xff]
    %v95 = vld [vmem:[#allocation6 + $0x178] sm:$0xff]
    %v97 = vcombine.high %v46, %v46
    %99 = vmatprep.subr.mxu0 0.0
    %v100 = vand.u32 %v48, 4294901760
    %101 = vmatpush1.msra.mxu0 %v100
    %102 = vmatprep.subr.mxu0 0.0
    %v103 = vand.u32 %v49, 4294901760
    %104 = vmatpush1.msra.mxu0 %v103
    %105 = vmatprep.subr.mxu0 0.0
    %v106 = vand.u32 %v50, 4294901760
    %107 = vmatpush1.msra.mxu0 %v106
    %108 = vmatprep.subr.mxu0 0.0
    %v109 = vand.u32 %v51, 4294901760
    %110 = vmatpush1.msra.mxu0 %v109
    %111 = vmatprep.subr.mxu0 0.0
    %v112 = vand.u32 %v52, 4294901760
    %113 = vmatpush1.msra.mxu0 %v112
    %114 = vmatprep.subr.mxu0 0.0
    %v115 = vand.u32 %v53, 4294901760
    %116 = vmatpush1.msra.mxu0 %v115
    %117 = vmatprep.subr.mxu0 0.0
    %v118 = vand.u32 %v54, 4294901760
    %119 = vmatpush1.msra.mxu0 %v118
    %120 = vmatprep.subr.mxu0 0.0
    %v121 = vand.u32 %v55, 4294901760
    %122 = vmatpush1.msra.mxu0 %v121
    %123 = vmatprep.subr.mxu0 0.0
    %v124 = vand.u32 %v56, 4294901760
    %125 = vmatpush1.msra.mxu0 %v124
    %126 = vmatprep.subr.mxu0 0.0
    %v127 = vand.u32 %v57, 4294901760
    %128 = vmatpush1.msra.mxu0 %v127
    %129 = vmatprep.subr.mxu0 0.0
    %v130 = vand.u32 %v58, 4294901760
    %131 = vmatpush1.msra.mxu0 %v130
    %132 = vmatprep.subr.mxu0 0.0
    %v133 = vand.u32 %v59, 4294901760
    %134 = vmatpush1.msra.mxu0 %v133
    %135 = vmatprep.subr.mxu0 0.0
    %v136 = vand.u32 %v60, 4294901760
    %137 = vmatpush1.msra.mxu0 %v136
    %138 = vmatprep.subr.mxu0 0.0
    %v139 = vand.u32 %v61, 4294901760
    %140 = vmatpush1.msra.mxu0 %v139
    %141 = vmatprep.subr.mxu0 0.0
    %v142 = vand.u32 %v62, 4294901760
    %143 = vmatpush1.msra.mxu0 %v142
    %144 = vmatprep.subr.mxu0 0.0
    %v145 = vand.u32 %v63, 4294901760
    %146 = vmatpush1.msra.mxu0 %v145
    %147 = vmatprep.subr.mxu0 0.0
    %v148 = vand.u32 %v64, 4294901760
    %149 = vmatpush1.msra.mxu0 %v148
    %150 = vmatprep.subr.mxu0 0.0
    %v151 = vand.u32 %v65, 4294901760
    %152 = vmatpush1.msra.mxu0 %v151
    %153 = vmatprep.subr.mxu0 0.0
    %v154 = vand.u32 %v66, 4294901760
    %155 = vmatpush1.msra.mxu0 %v154
    %156 = vmatprep.subr.mxu0 0.0
    %v157 = vand.u32 %v67, 4294901760
    %158 = vmatpush1.msra.mxu0 %v157
    %159 = vmatprep.subr.mxu0 0.0
    %v160 = vand.u32 %v68, 4294901760
    %161 = vmatpush1.msra.mxu0 %v160
    %162 = vmatprep.subr.mxu0 0.0
    %v163 = vand.u32 %v69, 4294901760
    %164 = vmatpush1.msra.mxu0 %v163
    %165 = vmatprep.subr.mxu0 0.0
    %v166 = vand.u32 %v70, 4294901760
    %167 = vmatpush1.msra.mxu0 %v166
    %168 = vmatprep.subr.mxu0 0.0
    %v169 = vand.u32 %v71, 4294901760
    %170 = vmatpush1.msra.mxu0 %v169
    %171 = vmatprep.subr.mxu0 0.0
    %v172 = vand.u32 %v72, 4294901760
    %173 = vmatpush1.msra.mxu0 %v172
    %174 = vmatprep.subr.mxu0 0.0
    %v175 = vand.u32 %v73, 4294901760
    %176 = vmatpush1.msra.mxu0 %v175
    %177 = vmatprep.subr.mxu0 0.0
    %v178 = vand.u32 %v74, 4294901760
    %179 = vmatpush1.msra.mxu0 %v178
    %180 = vmatprep.subr.mxu0 0.0
    %v181 = vand.u32 %v75, 4294901760
    %182 = vmatpush1.msra.mxu0 %v181
    %183 = vmatprep.subr.mxu0 0.0
    %v184 = vand.u32 %v76, 4294901760
    %185 = vmatpush1.msra.mxu0 %v184
    %186 = vmatprep.subr.mxu0 0.0
    %v187 = vand.u32 %v77, 4294901760
    %188 = vmatpush1.msra.mxu0 %v187
    %189 = vmatprep.subr.mxu0 0.0
    %v190 = vand.u32 %v78, 4294901760
    %191 = vmatpush1.msra.mxu0 %v190
    %192 = vmatprep.subr.mxu0 0.0
    %v193 = vand.u32 %v79, 4294901760
    %194 = vmatpush1.msra.mxu0 %v193
    %v195 = vand.u32 %v97, 4294901760
    %v196 = vsub.f32 %v97, %v195
    %v197 = vand.u32 %v196, 4294901760
    %v198 = vsub.f32 %v196, %v197
    %v199 = vand.u32 %v198, 4294901760
    %200 = vmatprep.mubr.f32.mxu0 %v199
    %v201 = vand.u32 %v46, 4294901760
    %v202 = vsub.f32 %v46, %v201
    %v203 = vand.u32 %v202, 4294901760
    %v204 = vsub.f32 %v202, %v203
    %v205 = vand.u32 %v204, 4294901760
    %206 = vmatmul.mubr.f32.gmra.mrb[0].mxu0 %v205
    %v207 = vpop.f32.mrb[0].mxu0
    %v208 = vadd.f32 0.0, %v207
    %v209 = vpop.f32.mrb[0].mxu0
    %210 = vdwg.mxu0
    %211 = vmatprep.subr.mxu0 0.0
    %v212 = vand.u32 %v48, 4294901760
    %v213 = vsub.f32 %v48, %v212
    %v214 = vand.u32 %v213, 4294901760
    %v215 = vsub.f32 %v213, %v214
    %v216 = vand.u32 %v215, 4294901760
    %217 = vmatpush1.msra.mxu0 %v216
    %218 = vmatprep.subr.mxu0 0.0
    %v219 = vand.u32 %v49, 4294901760
    %v220 = vsub.f32 %v49, %v219
    %v221 = vand.u32 %v220, 4294901760
    %v222 = vsub.f32 %v220, %v221
    %v223 = vand.u32 %v222, 4294901760
    %224 = vmatpush1.msra.mxu0 %v223
    %225 = vmatprep.subr.mxu0 0.0
    %v226 = vand.u32 %v50, 4294901760
    %v227 = vsub.f32 %v50, %v226
    %v228 = vand.u32 %v227, 4294901760
    %v229 = vsub.f32 %v227, %v228
    %v230 = vand.u32 %v229, 4294901760
    %231 = vmatpush1.msra.mxu0 %v230
    %232 = vmatprep.subr.mxu0 0.0
    %v233 = vand.u32 %v51, 4294901760
    %v234 = vsub.f32 %v51, %v233
    %v235 = vand.u32 %v234, 4294901760
    %v236 = vsub.f32 %v234, %v235
    %v237 = vand.u32 %v236, 4294901760
    %238 = vmatpush1.msra.mxu0 %v237
    %239 = vmatprep.subr.mxu0 0.0
    %v240 = vand.u32 %v52, 4294901760
    %v241 = vsub.f32 %v52, %v240
    %v242 = vand.u32 %v241, 4294901760
    %v243 = vsub.f32 %v241, %v242
    %v244 = vand.u32 %v243, 4294901760
    %245 = vmatpush1.msra.mxu0 %v244
    %246 = vmatprep.subr.mxu0 0.0
    %v247 = vand.u32 %v53, 4294901760
    %v248 = vsub.f32 %v53, %v247
    %v249 = vand.u32 %v248, 4294901760
    %v250 = vsub.f32 %v248, %v249
    %v251 = vand.u32 %v250, 4294901760
    %252 = vmatpush1.msra.mxu0 %v251
    %253 = vmatprep.subr.mxu0 0.0
    %v254 = vand.u32 %v54, 4294901760
    %v255 = vsub.f32 %v54, %v254
    %v256 = vand.u32 %v255, 4294901760
    %v257 = vsub.f32 %v255, %v256
    %v258 = vand.u32 %v257, 4294901760
    %259 = vmatpush1.msra.mxu0 %v258
    %260 = vmatprep.subr.mxu0 0.0
    %v261 = vand.u32 %v55, 4294901760
    %v262 = vsub.f32 %v55, %v261
    %v263 = vand.u32 %v262, 4294901760
    %v264 = vsub.f32 %v262, %v263
    %v265 = vand.u32 %v264, 4294901760
    %266 = vmatpush1.msra.mxu0 %v265
    %267 = vmatprep.subr.mxu0 0.0
    %v268 = vand.u32 %v56, 4294901760
    %v269 = vsub.f32 %v56, %v268
    %v270 = vand.u32 %v269, 4294901760
    %v271 = vsub.f32 %v269, %v270
    %v272 = vand.u32 %v271, 4294901760
    %273 = vmatpush1.msra.mxu0 %v272
    %274 = vmatprep.subr.mxu0 0.0
    %v275 = vand.u32 %v57, 4294901760
    %v276 = vsub.f32 %v57, %v275
    %v277 = vand.u32 %v276, 4294901760
    %v278 = vsub.f32 %v276, %v277
    %v279 = vand.u32 %v278, 4294901760
    %280 = vmatpush1.msra.mxu0 %v279
    %281 = vmatprep.subr.mxu0 0.0
    %v282 = vand.u32 %v58, 4294901760
    %v283 = vsub.f32 %v58, %v282
    %v284 = vand.u32 %v283, 4294901760
    %v285 = vsub.f32 %v283, %v284
    %v286 = vand.u32 %v285, 4294901760
    %287 = vmatpush1.msra.mxu0 %v286
    %288 = vmatprep.subr.mxu0 0.0
    %v289 = vand.u32 %v59, 4294901760
    %v290 = vsub.f32 %v59, %v289
    %v291 = vand.u32 %v290, 4294901760
    %v292 = vsub.f32 %v290, %v291
    %v293 = vand.u32 %v292, 4294901760
    %294 = vmatpush1.msra.mxu0 %v293
    %295 = vmatprep.subr.mxu0 0.0
    %v296 = vand.u32 %v60, 4294901760
    %v297 = vsub.f32 %v60, %v296
    %v298 = vand.u32 %v297, 4294901760
    %v299 = vsub.f32 %v297, %v298
    %v300 = vand.u32 %v299, 4294901760
    %301 = vmatpush1.msra.mxu0 %v300
    %302 = vmatprep.subr.mxu0 0.0
    %v303 = vand.u32 %v61, 4294901760
    %v304 = vsub.f32 %v61, %v303
    %v305 = vand.u32 %v304, 4294901760
    %v306 = vsub.f32 %v304, %v305
    %v307 = vand.u32 %v306, 4294901760
    %308 = vmatpush1.msra.mxu0 %v307
    %309 = vmatprep.subr.mxu0 0.0
    %v310 = vand.u32 %v62, 4294901760
    %v311 = vsub.f32 %v62, %v310
    %v312 = vand.u32 %v311, 4294901760
    %v313 = vsub.f32 %v311, %v312
    %v314 = vand.u32 %v313, 4294901760
    %315 = vmatpush1.msra.mxu0 %v314
    %316 = vmatprep.subr.mxu0 0.0
    %v317 = vand.u32 %v63, 4294901760
    %v318 = vsub.f32 %v63, %v317
    %v319 = vand.u32 %v318, 4294901760
    %v320 = vsub.f32 %v318, %v319
    %v321 = vand.u32 %v320, 4294901760
    %322 = vmatpush1.msra.mxu0 %v321
    %323 = vmatprep.subr.mxu0 0.0
    %v324 = vand.u32 %v64, 4294901760
    %v325 = vsub.f32 %v64, %v324
    %v326 = vand.u32 %v325, 4294901760
    %v327 = vsub.f32 %v325, %v326
    %v328 = vand.u32 %v327, 4294901760
    %329 = vmatpush1.msra.mxu0 %v328
    %330 = vmatprep.subr.mxu0 0.0
    %v331 = vand.u32 %v65, 4294901760
    %v332 = vsub.f32 %v65, %v331
    %v333 = vand.u32 %v332, 4294901760
    %v334 = vsub.f32 %v332, %v333
    %v335 = vand.u32 %v334, 4294901760
    %336 = vmatpush1.msra.mxu0 %v335
    %337 = vmatprep.subr.mxu0 0.0
    %v338 = vand.u32 %v66, 4294901760
    %v339 = vsub.f32 %v66, %v338
    %v340 = vand.u32 %v339, 4294901760
    %v341 = vsub.f32 %v339, %v340
    %v342 = vand.u32 %v341, 4294901760
    %343 = vmatpush1.msra.mxu0 %v342
    %344 = vmatprep.subr.mxu0 0.0
    %v345 = vand.u32 %v67, 4294901760
    %v346 = vsub.f32 %v67, %v345
    %v347 = vand.u32 %v346, 4294901760
    %v348 = vsub.f32 %v346, %v347
    %v349 = vand.u32 %v348, 4294901760
    %350 = vmatpush1.msra.mxu0 %v349
    %351 = vmatprep.subr.mxu0 0.0
    %v352 = vand.u32 %v68, 4294901760
    %v353 = vsub.f32 %v68, %v352
    %v354 = vand.u32 %v353, 4294901760
    %v355 = vsub.f32 %v353, %v354
    %v356 = vand.u32 %v355, 4294901760
    %357 = vmatpush1.msra.mxu0 %v356
    %358 = vmatprep.subr.mxu0 0.0
    %v359 = vand.u32 %v69, 4294901760
    %v360 = vsub.f32 %v69, %v359
    %v361 = vand.u32 %v360, 4294901760
    %v362 = vsub.f32 %v360, %v361
    %v363 = vand.u32 %v362, 4294901760
    %364 = vmatpush1.msra.mxu0 %v363
    %365 = vmatprep.subr.mxu0 0.0
    %v366 = vand.u32 %v70, 4294901760
    %v367 = vsub.f32 %v70, %v366
    %v368 = vand.u32 %v367, 4294901760
    %v369 = vsub.f32 %v367, %v368
    %v370 = vand.u32 %v369, 4294901760
    %371 = vmatpush1.msra.mxu0 %v370
    %372 = vmatprep.subr.mxu0 0.0
    %v373 = vand.u32 %v71, 4294901760
    %v374 = vsub.f32 %v71, %v373
    %v375 = vand.u32 %v374, 4294901760
    %v376 = vsub.f32 %v374, %v375
    %v377 = vand.u32 %v376, 4294901760
    %378 = vmatpush1.msra.mxu0 %v377
    %379 = vmatprep.subr.mxu0 0.0
    %v380 = vand.u32 %v72, 4294901760
    %v381 = vsub.f32 %v72, %v380
    %v382 = vand.u32 %v381, 4294901760
    %v383 = vsub.f32 %v381, %v382
    %v384 = vand.u32 %v383, 4294901760
    %385 = vmatpush1.msra.mxu0 %v384
    %386 = vmatprep.subr.mxu0 0.0
    %v387 = vand.u32 %v73, 4294901760
    %v388 = vsub.f32 %v73, %v387
    %v389 = vand.u32 %v388, 4294901760
    %v390 = vsub.f32 %v388, %v389
    %v391 = vand.u32 %v390, 4294901760
    %392 = vmatpush1.msra.mxu0 %v391
    %393 = vmatprep.subr.mxu0 0.0
    %v394 = vand.u32 %v74, 4294901760
    %v395 = vsub.f32 %v74, %v394
    %v396 = vand.u32 %v395, 4294901760
    %v397 = vsub.f32 %v395, %v396
    %v398 = vand.u32 %v397, 4294901760
    %399 = vmatpush1.msra.mxu0 %v398
    %400 = vmatprep.subr.mxu0 0.0
    %v401 = vand.u32 %v75, 4294901760
    %v402 = vsub.f32 %v75, %v401
    %v403 = vand.u32 %v402, 4294901760
    %v404 = vsub.f32 %v402, %v403
    %v405 = vand.u32 %v404, 4294901760
    %406 = vmatpush1.msra.mxu0 %v405
    %407 = vmatprep.subr.mxu0 0.0
    %v408 = vand.u32 %v76, 4294901760
    %v409 = vsub.f32 %v76, %v408
    %v410 = vand.u32 %v409, 4294901760
    %v411 = vsub.f32 %v409, %v410
    %v412 = vand.u32 %v411, 4294901760
    %413 = vmatpush1.msra.mxu0 %v412
    %414 = vmatprep.subr.mxu0 0.0
    %v415 = vand.u32 %v77, 4294901760
    %v416 = vsub.f32 %v77, %v415
    %v417 = vand.u32 %v416, 4294901760
    %v418 = vsub.f32 %v416, %v417
    %v419 = vand.u32 %v418, 4294901760
    %420 = vmatpush1.msra.mxu0 %v419
    %421 = vmatprep.subr.mxu0 0.0
    %v422 = vand.u32 %v78, 4294901760
    %v423 = vsub.f32 %v78, %v422
    %v424 = vand.u32 %v423, 4294901760
    %v425 = vsub.f32 %v423, %v424
    %v426 = vand.u32 %v425, 4294901760
    %427 = vmatpush1.msra.mxu0 %v426
    %428 = vmatprep.subr.mxu0 0.0
    %v429 = vand.u32 %v79, 4294901760
    %v430 = vsub.f32 %v79, %v429
    %v431 = vand.u32 %v430, 4294901760
    %v432 = vsub.f32 %v430, %v431
    %v433 = vand.u32 %v432, 4294901760
    %434 = vmatpush1.msra.mxu0 %v433
    %v435 = vand.u32 %v97, 4294901760
    %436 = vmatprep.mubr.f32.mxu0 %v435
    %v437 = vand.u32 %v46, 4294901760
    %438 = vmatmul.mubr.f32.gmra.mrb[0].mxu0 %v437
    %v439 = vpop.f32.mrb[0].mxu0
    %v440 = vadd.f32 %v208, %v439
    %v441 = vpop.f32.mrb[0].mxu0
    %442 = vdwg.mxu0
    %443 = vmatprep.subr.mxu0 0.0
    %v444 = vand.u32 %v48, 4294901760
    %v445 = vsub.f32 %v48, %v444
    %446 = vmatpush1.msra.mxu0 %v445
    %447 = vmatprep.subr.mxu0 0.0
    %v448 = vand.u32 %v49, 4294901760
    %v449 = vsub.f32 %v49, %v448
    %450 = vmatpush1.msra.mxu0 %v449
    %451 = vmatprep.subr.mxu0 0.0
    %v452 = vand.u32 %v50, 4294901760
    %v453 = vsub.f32 %v50, %v452
    %454 = vmatpush1.msra.mxu0 %v453
    %455 = vmatprep.subr.mxu0 0.0
    %v456 = vand.u32 %v51, 4294901760
    %v457 = vsub.f32 %v51, %v456
    %458 = vmatpush1.msra.mxu0 %v457
    %459 = vmatprep.subr.mxu0 0.0
    %v460 = vand.u32 %v52, 4294901760
    %v461 = vsub.f32 %v52, %v460
    %462 = vmatpush1.msra.mxu0 %v461
    %463 = vmatprep.subr.mxu0 0.0
    %v464 = vand.u32 %v53, 4294901760
    %v465 = vsub.f32 %v53, %v464
    %466 = vmatpush1.msra.mxu0 %v465
    %467 = vmatprep.subr.mxu0 0.0
    %v468 = vand.u32 %v54, 4294901760
    %v469 = vsub.f32 %v54, %v468
    %470 = vmatpush1.msra.mxu0 %v469
    %471 = vmatprep.subr.mxu0 0.0
    %v472 = vand.u32 %v55, 4294901760
    %v473 = vsub.f32 %v55, %v472
    %474 = vmatpush1.msra.mxu0 %v473
    %475 = vmatprep.subr.mxu0 0.0
    %v476 = vand.u32 %v56, 4294901760
    %v477 = vsub.f32 %v56, %v476
    %478 = vmatpush1.msra.mxu0 %v477
    %479 = vmatprep.subr.mxu0 0.0
    %v480 = vand.u32 %v57, 4294901760
    %v481 = vsub.f32 %v57, %v480
    %482 = vmatpush1.msra.mxu0 %v481
    %483 = vmatprep.subr.mxu0 0.0
    %v484 = vand.u32 %v58, 4294901760
    %v485 = vsub.f32 %v58, %v484
    %486 = vmatpush1.msra.mxu0 %v485
    %487 = vmatprep.subr.mxu0 0.0
    %v488 = vand.u32 %v59, 4294901760
    %v489 = vsub.f32 %v59, %v488
    %490 = vmatpush1.msra.mxu0 %v489
    %491 = vmatprep.subr.mxu0 0.0
    %v492 = vand.u32 %v60, 4294901760
    %v493 = vsub.f32 %v60, %v492
    %494 = vmatpush1.msra.mxu0 %v493
    %495 = vmatprep.subr.mxu0 0.0
    %v496 = vand.u32 %v61, 4294901760
    %v497 = vsub.f32 %v61, %v496
    %498 = vmatpush1.msra.mxu0 %v497
    %499 = vmatprep.subr.mxu0 0.0
    %v500 = vand.u32 %v62, 4294901760
    %v501 = vsub.f32 %v62, %v500
    %502 = vmatpush1.msra.mxu0 %v501
    %503 = vmatprep.subr.mxu0 0.0
    %v504 = vand.u32 %v63, 4294901760
    %v505 = vsub.f32 %v63, %v504
    %506 = vmatpush1.msra.mxu0 %v505
    %507 = vmatprep.subr.mxu0 0.0
    %v508 = vand.u32 %v64, 4294901760
    %v509 = vsub.f32 %v64, %v508
    %510 = vmatpush1.msra.mxu0 %v509
    %511 = vmatprep.subr.mxu0 0.0
    %v512 = vand.u32 %v65, 4294901760
    %v513 = vsub.f32 %v65, %v512
    %514 = vmatpush1.msra.mxu0 %v513
    %515 = vmatprep.subr.mxu0 0.0
    %v516 = vand.u32 %v66, 4294901760
    %v517 = vsub.f32 %v66, %v516
    %518 = vmatpush1.msra.mxu0 %v517
    %519 = vmatprep.subr.mxu0 0.0
    %v520 = vand.u32 %v67, 4294901760
    %v521 = vsub.f32 %v67, %v520
    %522 = vmatpush1.msra.mxu0 %v521
    %523 = vmatprep.subr.mxu0 0.0
    %v524 = vand.u32 %v68, 4294901760
    %v525 = vsub.f32 %v68, %v524
    %526 = vmatpush1.msra.mxu0 %v525
    %527 = vmatprep.subr.mxu0 0.0
    %v528 = vand.u32 %v69, 4294901760
    %v529 = vsub.f32 %v69, %v528
    %530 = vmatpush1.msra.mxu0 %v529
    %531 = vmatprep.subr.mxu0 0.0
    %v532 = vand.u32 %v70, 4294901760
    %v533 = vsub.f32 %v70, %v532
    %534 = vmatpush1.msra.mxu0 %v533
    %535 = vmatprep.subr.mxu0 0.0
    %v536 = vand.u32 %v71, 4294901760
    %v537 = vsub.f32 %v71, %v536
    %538 = vmatpush1.msra.mxu0 %v537
    %539 = vmatprep.subr.mxu0 0.0
    %v540 = vand.u32 %v72, 4294901760
    %v541 = vsub.f32 %v72, %v540
    %542 = vmatpush1.msra.mxu0 %v541
    %543 = vmatprep.subr.mxu0 0.0
    %v544 = vand.u32 %v73, 4294901760
    %v545 = vsub.f32 %v73, %v544
    %546 = vmatpush1.msra.mxu0 %v545
    %547 = vmatprep.subr.mxu0 0.0
    %v548 = vand.u32 %v74, 4294901760
    %v549 = vsub.f32 %v74, %v548
    %550 = vmatpush1.msra.mxu0 %v549
    %551 = vmatprep.subr.mxu0 0.0
    %v552 = vand.u32 %v75, 4294901760
    %v553 = vsub.f32 %v75, %v552
    %554 = vmatpush1.msra.mxu0 %v553
    %555 = vmatprep.subr.mxu0 0.0
    %v556 = vand.u32 %v76, 4294901760
    %v557 = vsub.f32 %v76, %v556
    %558 = vmatpush1.msra.mxu0 %v557
    %559 = vmatprep.subr.mxu0 0.0
    %v560 = vand.u32 %v77, 4294901760
    %v561 = vsub.f32 %v77, %v560
    %562 = vmatpush1.msra.mxu0 %v561
    %563 = vmatprep.subr.mxu0 0.0
    %v564 = vand.u32 %v78, 4294901760
    %v565 = vsub.f32 %v78, %v564
    %566 = vmatpush1.msra.mxu0 %v565
    %567 = vmatprep.subr.mxu0 0.0
    %v568 = vand.u32 %v79, 4294901760
    %v569 = vsub.f32 %v79, %v568
    %570 = vmatpush1.msra.mxu0 %v569
    %v571 = vand.u32 %v97, 4294901760
    %v572 = vsub.f32 %v97, %v571
    %573 = vmatprep.mubr.f32.mxu0 %v572
    %v574 = vand.u32 %v46, 4294901760
    %v575 = vsub.f32 %v46, %v574
    %576 = vmatmul.mubr.f32.gmra.mrb[0].mxu0 %v575
    %v577 = vpop.f32.mrb[0].mxu0
    %v578 = vadd.f32 %v440, %v577
    %v579 = vpop.f32.mrb[0].mxu0
    %580 = vdwg.mxu0
    %581 = vmatprep.subr.mxu0 0.0
    %v582 = vand.u32 %v48, 4294901760
    %583 = vmatpush1.msra.mxu0 %v582
    %584 = vmatprep.subr.mxu0 0.0
    %v585 = vand.u32 %v49, 4294901760
    %586 = vmatpush1.msra.mxu0 %v585
    %587 = vmatprep.subr.mxu0 0.0
    %v588 = vand.u32 %v50, 4294901760
    %589 = vmatpush1.msra.mxu0 %v588
    %590 = vmatprep.subr.mxu0 0.0
    %v591 = vand.u32 %v51, 4294901760
    %592 = vmatpush1.msra.mxu0 %v591
    %593 = vmatprep.subr.mxu0 0.0
    %v594 = vand.u32 %v52, 4294901760
    %595 = vmatpush1.msra.mxu0 %v594
    %596 = vmatprep.subr.mxu0 0.0
    %v597 = vand.u32 %v53, 4294901760
    %598 = vmatpush1.msra.mxu0 %v597
    %599 = vmatprep.subr.mxu0 0.0
    %v600 = vand.u32 %v54, 4294901760
    %601 = vmatpush1.msra.mxu0 %v600
    %602 = vmatprep.subr.mxu0 0.0
    %v603 = vand.u32 %v55, 4294901760
    %604 = vmatpush1.msra.mxu0 %v603
    %605 = vmatprep.subr.mxu0 0.0
    %v606 = vand.u32 %v56, 4294901760
    %607 = vmatpush1.msra.mxu0 %v606
    %608 = vmatprep.subr.mxu0 0.0
    %v609 = vand.u32 %v57, 4294901760
    %610 = vmatpush1.msra.mxu0 %v609
    %611 = vmatprep.subr.mxu0 0.0
    %v612 = vand.u32 %v58, 4294901760
    %613 = vmatpush1.msra.mxu0 %v612
    %614 = vmatprep.subr.mxu0 0.0
    %v615 = vand.u32 %v59, 4294901760
    %616 = vmatpush1.msra.mxu0 %v615
    %617 = vmatprep.subr.mxu0 0.0
    %v618 = vand.u32 %v60, 4294901760
    %619 = vmatpush1.msra.mxu0 %v618
    %620 = vmatprep.subr.mxu0 0.0
    %v621 = vand.u32 %v61, 4294901760
    %622 = vmatpush1.msra.mxu0 %v621
    %623 = vmatprep.subr.mxu0 0.0
    %v624 = vand.u32 %v62, 4294901760
    %625 = vmatpush1.msra.mxu0 %v624
    %626 = vmatprep.subr.mxu0 0.0
    %v627 = vand.u32 %v63, 4294901760
    %628 = vmatpush1.msra.mxu0 %v627
    %629 = vmatprep.subr.mxu0 0.0
    %v630 = vand.u32 %v64, 4294901760
    %631 = vmatpush1.msra.mxu0 %v630
    %632 = vmatprep.subr.mxu0 0.0
    %v633 = vand.u32 %v65, 4294901760
    %634 = vmatpush1.msra.mxu0 %v633
    %635 = vmatprep.subr.mxu0 0.0
    %v636 = vand.u32 %v66, 4294901760
    %637 = vmatpush1.msra.mxu0 %v636
    %638 = vmatprep.subr.mxu0 0.0
    %v639 = vand.u32 %v67, 4294901760
    %640 = vmatpush1.msra.mxu0 %v639
    %641 = vmatprep.subr.mxu0 0.0
    %v642 = vand.u32 %v68, 4294901760
    %643 = vmatpush1.msra.mxu0 %v642
    %644 = vmatprep.subr.mxu0 0.0
    %v645 = vand.u32 %v69, 4294901760
    %646 = vmatpush1.msra.mxu0 %v645
    %647 = vmatprep.subr.mxu0 0.0
    %v648 = vand.u32 %v70, 4294901760
    %649 = vmatpush1.msra.mxu0 %v648
    %650 = vmatprep.subr.mxu0 0.0
    %v651 = vand.u32 %v71, 4294901760
    %652 = vmatpush1.msra.mxu0 %v651
    %653 = vmatprep.subr.mxu0 0.0
    %v654 = vand.u32 %v72, 4294901760
    %655 = vmatpush1.msra.mxu0 %v654
    %656 = vmatprep.subr.mxu0 0.0
    %v657 = vand.u32 %v73, 4294901760
    %658 = vmatpush1.msra.mxu0 %v657
    %659 = vmatprep.subr.mxu0 0.0
    %v660 = vand.u32 %v74, 4294901760
    %661 = vmatpush1.msra.mxu0 %v660
    %662 = vmatprep.subr.mxu0 0.0
    %v663 = vand.u32 %v75, 4294901760
    %664 = vmatpush1.msra.mxu0 %v663
    %665 = vmatprep.subr.mxu0 0.0
    %v666 = vand.u32 %v76, 4294901760
    %667 = vmatpush1.msra.mxu0 %v666
    %668 = vmatprep.subr.mxu0 0.0
    %v669 = vand.u32 %v77, 4294901760
    %670 = vmatpush1.msra.mxu0 %v669
    %671 = vmatprep.subr.mxu0 0.0
    %v672 = vand.u32 %v78, 4294901760
    %673 = vmatpush1.msra.mxu0 %v672
    %674 = vmatprep.subr.mxu0 0.0
    %v675 = vand.u32 %v79, 4294901760
    %676 = vmatpush1.msra.mxu0 %v675
    %v677 = vand.u32 %v97, 4294901760
    %v678 = vsub.f32 %v97, %v677
    %v679 = vand.u32 %v678, 4294901760
    %680 = vmatprep.mubr.f32.mxu0 %v679
    %v681 = vand.u32 %v46, 4294901760
    %v682 = vsub.f32 %v46, %v681
    %v683 = vand.u32 %v682, 4294901760
    %684 = vmatmul.mubr.f32.gmra.mrb[0].mxu0 %v683
    %v685 = vpop.f32.mrb[0].mxu0
    %v686 = vadd.f32 %v578, %v685
    %v687 = vpop.f32.mrb[0].mxu0
    %688 = vdwg.mxu0
    %689 = vmatprep.subr.mxu0 0.0
    %v690 = vand.u32 %v48, 4294901760
    %v691 = vsub.f32 %v48, %v690
    %v692 = vand.u32 %v691, 4294901760
    %693 = vmatpush1.msra.mxu0 %v692
    %694 = vmatprep.subr.mxu0 0.0
    %v695 = vand.u32 %v49, 4294901760
    %v696 = vsub.f32 %v49, %v695
    %v697 = vand.u32 %v696, 4294901760
    %698 = vmatpush1.msra.mxu0 %v697
    %699 = vmatprep.subr.mxu0 0.0
    %v700 = vand.u32 %v50, 4294901760
    %v701 = vsub.f32 %v50, %v700
    %v702 = vand.u32 %v701, 4294901760
    %703 = vmatpush1.msra.mxu0 %v702
    %704 = vmatprep.subr.mxu0 0.0
    %v705 = vand.u32 %v51, 4294901760
    %v706 = vsub.f32 %v51, %v705
    %v707 = vand.u32 %v706, 4294901760
    %708 = vmatpush1.msra.mxu0 %v707
    %709 = vmatprep.subr.mxu0 0.0
    %v710 = vand.u32 %v52, 4294901760
    %v711 = vsub.f32 %v52, %v710
    %v712 = vand.u32 %v711, 4294901760
    %713 = vmatpush1.msra.mxu0 %v712
    %714 = vmatprep.subr.mxu0 0.0
    %v715 = vand.u32 %v53, 4294901760
    %v716 = vsub.f32 %v53, %v715
    %v717 = vand.u32 %v716, 4294901760
    %718 = vmatpush1.msra.mxu0 %v717
    %719 = vmatprep.subr.mxu0 0.0
    %v720 = vand.u32 %v54, 4294901760
    %v721 = vsub.f32 %v54, %v720
    %v722 = vand.u32 %v721, 4294901760
    %723 = vmatpush1.msra.mxu0 %v722
    %724 = vmatprep.subr.mxu0 0.0
    %v725 = vand.u32 %v55, 4294901760
    %v726 = vsub.f32 %v55, %v725
    %v727 = vand.u32 %v726, 4294901760
    %728 = vmatpush1.msra.mxu0 %v727
    %729 = vmatprep.subr.mxu0 0.0
    %v730 = vand.u32 %v56, 4294901760
    %v731 = vsub.f32 %v56, %v730
    %v732 = vand.u32 %v731, 4294901760
    %733 = vmatpush1.msra.mxu0 %v732
    %734 = vmatprep.subr.mxu0 0.0
    %v735 = vand.u32 %v57, 4294901760
    %v736 = vsub.f32 %v57, %v735
    %v737 = vand.u32 %v736, 4294901760
    %738 = vmatpush1.msra.mxu0 %v737
    %739 = vmatprep.subr.mxu0 0.0
    %v740 = vand.u32 %v58, 4294901760
    %v741 = vsub.f32 %v58, %v740
    %v742 = vand.u32 %v741, 4294901760
    %743 = vmatpush1.msra.mxu0 %v742
    %744 = vmatprep.subr.mxu0 0.0
    %v745 = vand.u32 %v59, 4294901760
    %v746 = vsub.f32 %v59, %v745
    %v747 = vand.u32 %v746, 4294901760
    %748 = vmatpush1.msra.mxu0 %v747
    %749 = vmatprep.subr.mxu0 0.0
    %v750 = vand.u32 %v60, 4294901760
    %v751 = vsub.f32 %v60, %v750
    %v752 = vand.u32 %v751, 4294901760
    %753 = vmatpush1.msra.mxu0 %v752
    %754 = vmatprep.subr.mxu0 0.0
    %v755 = vand.u32 %v61, 4294901760
    %v756 = vsub.f32 %v61, %v755
    %v757 = vand.u32 %v756, 4294901760
    %758 = vmatpush1.msra.mxu0 %v757
    %759 = vmatprep.subr.mxu0 0.0
    %v760 = vand.u32 %v62, 4294901760
    %v761 = vsub.f32 %v62, %v760
    %v762 = vand.u32 %v761, 4294901760
    %763 = vmatpush1.msra.mxu0 %v762
    %764 = vmatprep.subr.mxu0 0.0
    %v765 = vand.u32 %v63, 4294901760
    %v766 = vsub.f32 %v63, %v765
    %v767 = vand.u32 %v766, 4294901760
    %768 = vmatpush1.msra.mxu0 %v767
    %769 = vmatprep.subr.mxu0 0.0
    %v770 = vand.u32 %v64, 4294901760
    %v771 = vsub.f32 %v64, %v770
    %v772 = vand.u32 %v771, 4294901760
    %773 = vmatpush1.msra.mxu0 %v772
    %774 = vmatprep.subr.mxu0 0.0
    %v775 = vand.u32 %v65, 4294901760
    %v776 = vsub.f32 %v65, %v775
    %v777 = vand.u32 %v776, 4294901760
    %778 = vmatpush1.msra.mxu0 %v777
    %779 = vmatprep.subr.mxu0 0.0
    %v780 = vand.u32 %v66, 4294901760
    %v781 = vsub.f32 %v66, %v780
    %v782 = vand.u32 %v781, 4294901760
    %783 = vmatpush1.msra.mxu0 %v782
    %784 = vmatprep.subr.mxu0 0.0
    %v785 = vand.u32 %v67, 4294901760
    %v786 = vsub.f32 %v67, %v785
    %v787 = vand.u32 %v786, 4294901760
    %788 = vmatpush1.msra.mxu0 %v787
    %789 = vmatprep.subr.mxu0 0.0
    %v790 = vand.u32 %v68, 4294901760
    %v791 = vsub.f32 %v68, %v790
    %v792 = vand.u32 %v791, 4294901760
    %793 = vmatpush1.msra.mxu0 %v792
    %794 = vmatprep.subr.mxu0 0.0
    %v795 = vand.u32 %v69, 4294901760
    %v796 = vsub.f32 %v69, %v795
    %v797 = vand.u32 %v796, 4294901760
    %798 = vmatpush1.msra.mxu0 %v797
    %799 = vmatprep.subr.mxu0 0.0
    %v800 = vand.u32 %v70, 4294901760
    %v801 = vsub.f32 %v70, %v800
    %v802 = vand.u32 %v801, 4294901760
    %803 = vmatpush1.msra.mxu0 %v802
    %804 = vmatprep.subr.mxu0 0.0
    %v805 = vand.u32 %v71, 4294901760
    %v806 = vsub.f32 %v71, %v805
    %v807 = vand.u32 %v806, 4294901760
    %808 = vmatpush1.msra.mxu0 %v807
    %809 = vmatprep.subr.mxu0 0.0
    %v810 = vand.u32 %v72, 4294901760
    %v811 = vsub.f32 %v72, %v810
    %v812 = vand.u32 %v811, 4294901760
    %813 = vmatpush1.msra.mxu0 %v812
    %814 = vmatprep.subr.mxu0 0.0
    %v815 = vand.u32 %v73, 4294901760
    %v816 = vsub.f32 %v73, %v815
    %v817 = vand.u32 %v816, 4294901760
    %818 = vmatpush1.msra.mxu0 %v817
    %819 = vmatprep.subr.mxu0 0.0
    %v820 = vand.u32 %v74, 4294901760
    %v821 = vsub.f32 %v74, %v820
    %v822 = vand.u32 %v821, 4294901760
    %823 = vmatpush1.msra.mxu0 %v822
    %824 = vmatprep.subr.mxu0 0.0
    %v825 = vand.u32 %v75, 4294901760
    %v826 = vsub.f32 %v75, %v825
    %v827 = vand.u32 %v826, 4294901760
    %828 = vmatpush1.msra.mxu0 %v827
    %829 = vmatprep.subr.mxu0 0.0
    %v830 = vand.u32 %v76, 4294901760
    %v831 = vsub.f32 %v76, %v830
    %v832 = vand.u32 %v831, 4294901760
    %833 = vmatpush1.msra.mxu0 %v832
    %834 = vmatprep.subr.mxu0 0.0
    %v835 = vand.u32 %v77, 4294901760
    %v836 = vsub.f32 %v77, %v835
    %v837 = vand.u32 %v836, 4294901760
    %838 = vmatpush1.msra.mxu0 %v837
    %839 = vmatprep.subr.mxu0 0.0
    %v840 = vand.u32 %v78, 4294901760
    %v841 = vsub.f32 %v78, %v840
    %v842 = vand.u32 %v841, 4294901760
    %843 = vmatpush1.msra.mxu0 %v842
    %844 = vmatprep.subr.mxu0 0.0
    %v845 = vand.u32 %v79, 4294901760
    %v846 = vsub.f32 %v79, %v845
    %v847 = vand.u32 %v846, 4294901760
    %848 = vmatpush1.msra.mxu0 %v847
    %v849 = vand.u32 %v97, 4294901760
    %850 = vmatprep.mubr.f32.mxu0 %v849
    %v851 = vand.u32 %v46, 4294901760
    %852 = vmatmul.mubr.f32.gmra.mrb[0].mxu0 %v851
    %v853 = vpop.f32.mrb[0].mxu0
    %v854 = vadd.f32 %v686, %v853
    %v855 = vpop.f32.mrb[0].mxu0
    %856 = vdwg.mxu0
    %857 = vmatprep.subr.mxu0 0.0
    %v858 = vand.u32 %v48, 4294901760
    %859 = vmatpush1.msra.mxu0 %v858
    %860 = vmatprep.subr.mxu0 0.0
    %v861 = vand.u32 %v49, 4294901760
    %862 = vmatpush1.msra.mxu0 %v861
    %863 = vmatprep.subr.mxu0 0.0
    %v864 = vand.u32 %v50, 4294901760
    %865 = vmatpush1.msra.mxu0 %v864
    %866 = vmatprep.subr.mxu0 0.0
    %v867 = vand.u32 %v51, 4294901760
    %868 = vmatpush1.msra.mxu0 %v867
    %869 = vmatprep.subr.mxu0 0.0
    %v870 = vand.u32 %v52, 4294901760
    %871 = vmatpush1.msra.mxu0 %v870
    %872 = vmatprep.subr.mxu0 0.0
    %v873 = vand.u32 %v53, 4294901760
    %874 = vmatpush1.msra.mxu0 %v873
    %875 = vmatprep.subr.mxu0 0.0
    %v876 = vand.u32 %v54, 4294901760
    %877 = vmatpush1.msra.mxu0 %v876
    %878 = vmatprep.subr.mxu0 0.0
    %v879 = vand.u32 %v55, 4294901760
    %880 = vmatpush1.msra.mxu0 %v879
    %881 = vmatprep.subr.mxu0 0.0
    %v882 = vand.u32 %v56, 4294901760
    %883 = vmatpush1.msra.mxu0 %v882
    %884 = vmatprep.subr.mxu0 0.0
    %v885 = vand.u32 %v57, 4294901760
    %886 = vmatpush1.msra.mxu0 %v885
    %887 = vmatprep.subr.mxu0 0.0
    %v888 = vand.u32 %v58, 4294901760
    %889 = vmatpush1.msra.mxu0 %v888
    %890 = vmatprep.subr.mxu0 0.0
    %v891 = vand.u32 %v59, 4294901760
    %892 = vmatpush1.msra.mxu0 %v891
    %893 = vmatprep.subr.mxu0 0.0
    %v894 = vand.u32 %v60, 4294901760
    %895 = vmatpush1.msra.mxu0 %v894
    %896 = vmatprep.subr.mxu0 0.0
    %v897 = vand.u32 %v61, 4294901760
    %898 = vmatpush1.msra.mxu0 %v897
    %899 = vmatprep.subr.mxu0 0.0
    %v900 = vand.u32 %v62, 4294901760
    %901 = vmatpush1.msra.mxu0 %v900
    %902 = vmatprep.subr.mxu0 0.0
    %v903 = vand.u32 %v63, 4294901760
    %904 = vmatpush1.msra.mxu0 %v903
    %905 = vmatprep.subr.mxu0 0.0
    %v906 = vand.u32 %v64, 4294901760
    %907 = vmatpush1.msra.mxu0 %v906
    %908 = vmatprep.subr.mxu0 0.0
    %v909 = vand.u32 %v65, 4294901760
    %910 = vmatpush1.msra.mxu0 %v909
    %911 = vmatprep.subr.mxu0 0.0
    %v912 = vand.u32 %v66, 4294901760
    %913 = vmatpush1.msra.mxu0 %v912
    %914 = vmatprep.subr.mxu0 0.0
    %v915 = vand.u32 %v67, 4294901760
    %916 = vmatpush1.msra.mxu0 %v915
    %917 = vmatprep.subr.mxu0 0.0
    %v918 = vand.u32 %v68, 4294901760
    %919 = vmatpush1.msra.mxu0 %v918
    %920 = vmatprep.subr.mxu0 0.0
    %v921 = vand.u32 %v69, 4294901760
    %922 = vmatpush1.msra.mxu0 %v921
    %923 = vmatprep.subr.mxu0 0.0
    %v924 = vand.u32 %v70, 4294901760
    %925 = vmatpush1.msra.mxu0 %v924
    %926 = vmatprep.subr.mxu0 0.0
    %v927 = vand.u32 %v71, 4294901760
    %928 = vmatpush1.msra.mxu0 %v927
    %929 = vmatprep.subr.mxu0 0.0
    %v930 = vand.u32 %v72, 4294901760
    %931 = vmatpush1.msra.mxu0 %v930
    %932 = vmatprep.subr.mxu0 0.0
    %v933 = vand.u32 %v73, 4294901760
    %934 = vmatpush1.msra.mxu0 %v933
    %935 = vmatprep.subr.mxu0 0.0
    %v936 = vand.u32 %v74, 4294901760
    %937 = vmatpush1.msra.mxu0 %v936
    %938 = vmatprep.subr.mxu0 0.0
    %v939 = vand.u32 %v75, 4294901760
    %940 = vmatpush1.msra.mxu0 %v939
    %941 = vmatprep.subr.mxu0 0.0
    %v942 = vand.u32 %v76, 4294901760
    %943 = vmatpush1.msra.mxu0 %v942
    %944 = vmatprep.subr.mxu0 0.0
    %v945 = vand.u32 %v77, 4294901760
    %946 = vmatpush1.msra.mxu0 %v945
    %947 = vmatprep.subr.mxu0 0.0
    %v948 = vand.u32 %v78, 4294901760
    %949 = vmatpush1.msra.mxu0 %v948
    %950 = vmatprep.subr.mxu0 0.0
    %v951 = vand.u32 %v79, 4294901760
    %952 = vmatpush1.msra.mxu0 %v951
    %v953 = vand.u32 %v97, 4294901760
    %954 = vmatprep.mubr.f32.mxu0 %v953
    %v955 = vand.u32 %v46, 4294901760
    %956 = vmatmul.mubr.f32.gmra.mrb[0].mxu0 %v955
    %v957 = vpop.f32.mrb[0].mxu0
    %v958 = vadd.f32 %v854, %v957
    %v959 = vpop.f32.mrb[0].mxu0
    %960 = vdwg.mxu0
    %961 = vmatprep.subr.mxu0 0.0
    %v962 = vand.u32 %v80, 4294901760
    %963 = vmatpush1.msra.mxu0 %v962
    %964 = vmatprep.subr.mxu0 0.0
    %v965 = vand.u32 %v81, 4294901760
    %966 = vmatpush1.msra.mxu0 %v965
    %967 = vmatprep.subr.mxu0 0.0
    %v968 = vand.u32 %v82, 4294901760
    %969 = vmatpush1.msra.mxu0 %v968
    %970 = vmatprep.subr.mxu0 0.0
    %v971 = vand.u32 %v83, 4294901760
    %972 = vmatpush1.msra.mxu0 %v971
    %973 = vmatprep.subr.mxu0 0.0
    %v974 = vand.u32 %v84, 4294901760
    %975 = vmatpush1.msra.mxu0 %v974
    %976 = vmatprep.subr.mxu0 0.0
    %v977 = vand.u32 %v85, 4294901760
    %978 = vmatpush1.msra.mxu0 %v977
    %979 = vmatprep.subr.mxu0 0.0
    %v980 = vand.u32 %v86, 4294901760
    %981 = vmatpush1.msra.mxu0 %v980
    %982 = vmatprep.subr.mxu0 0.0
    %v983 = vand.u32 %v87, 4294901760
    %984 = vmatpush1.msra.mxu0 %v983
    %985 = vmatprep.subr.mxu0 0.0
    %v986 = vand.u32 %v88, 4294901760
    %987 = vmatpush1.msra.mxu0 %v986
    %988 = vmatprep.subr.mxu0 0.0
    %v989 = vand.u32 %v89, 4294901760
    %990 = vmatpush1.msra.mxu0 %v989
    %991 = vmatprep.subr.mxu0 0.0
    %v992 = vand.u32 %v90, 4294901760
    %993 = vmatpush1.msra.mxu0 %v992
    %994 = vmatprep.subr.mxu0 0.0
    %v995 = vand.u32 %v91, 4294901760
    %996 = vmatpush1.msra.mxu0 %v995
    %997 = vmatprep.subr.mxu0 0.0
    %v998 = vand.u32 %v92, 4294901760
    %999 = vmatpush1.msra.mxu0 %v998
    %1000 = vmatprep.subr.mxu0 0.0
    %v1001 = vand.u32 %v93, 4294901760
    %1002 = vmatpush1.msra.mxu0 %v1001
    %1003 = vmatprep.subr.mxu0 0.0
    %v1004 = vand.u32 %v94, 4294901760
    %1005 = vmatpush1.msra.mxu0 %v1004
    %1006 = vmatprep.subr.mxu0 0.0
    %v1007 = vand.u32 %v95, 4294901760
    %1008 = vmatpush1.msra.mxu0 %v1007
    %1009 = vmatprep.subr.mxu0 0.0
    %1010 = vmatpush1.msra.mxu0 0.0
    %1011 = vmatprep.subr.mxu0 0.0
    %1012 = vmatpush1.msra.mxu0 0.0
    %1013 = vmatprep.subr.mxu0 0.0
    %1014 = vmatpush1.msra.mxu0 0.0
    %1015 = vmatprep.subr.mxu0 0.0
    %1016 = vmatpush1.msra.mxu0 0.0
    %1017 = vmatprep.subr.mxu0 0.0
    %1018 = vmatpush1.msra.mxu0 0.0
    %1019 = vmatprep.subr.mxu0 0.0
    %1020 = vmatpush1.msra.mxu0 0.0
    %1021 = vmatprep.subr.mxu0 0.0
    %1022 = vmatpush1.msra.mxu0 0.0
    %1023 = vmatprep.subr.mxu0 0.0
    %1024 = vmatpush1.msra.mxu0 0.0
    %1025 = vmatprep.subr.mxu0 0.0
    %1026 = vmatpush1.msra.mxu0 0.0
    %1027 = vmatprep.subr.mxu0 0.0
    %1028 = vmatpush1.msra.mxu0 0.0
    %1029 = vmatprep.subr.mxu0 0.0
    %1030 = vmatpush1.msra.mxu0 0.0
    %1031 = vmatprep.subr.mxu0 0.0
    %1032 = vmatpush1.msra.mxu0 0.0
    %1033 = vmatprep.subr.mxu0 0.0
    %1034 = vmatpush1.msra.mxu0 0.0
    %1035 = vmatprep.subr.mxu0 0.0
    %1036 = vmatpush1.msra.mxu0 0.0
    %1037 = vmatprep.subr.mxu0 0.0
    %1038 = vmatpush1.msra.mxu0 0.0
    %1039 = vmatprep.subr.mxu0 0.0
    %1040 = vmatpush1.msra.mxu0 0.0
    %1041 = vmatprep.mubr.f32.mxu0 0.0
    %v1042 = vand.u32 %v47, 4294901760
    %v1043 = vsub.f32 %v47, %v1042
    %v1044 = vand.u32 %v1043, 4294901760
    %v1045 = vsub.f32 %v1043, %v1044
    %v1046 = vand.u32 %v1045, 4294901760
    %1047 = vmatmul.mubr.f32.gmra.mrb[0].mxu0 %v1046
    %v1048 = vpop.f32.mrb[0].mxu0
    %v1049 = vadd.f32 %v958, %v1048
    %v1050 = vpop.f32.mrb[0].mxu0
    %1051 = vdwg.mxu0
    %1052 = vmatprep.subr.mxu0 0.0
    %v1053 = vand.u32 %v80, 4294901760
    %v1054 = vsub.f32 %v80, %v1053
    %v1055 = vand.u32 %v1054, 4294901760
    %v1056 = vsub.f32 %v1054, %v1055
    %v1057 = vand.u32 %v1056, 4294901760
    %1058 = vmatpush1.msra.mxu0 %v1057
    %1059 = vmatprep.subr.mxu0 0.0
    %v1060 = vand.u32 %v81, 4294901760
    %v1061 = vsub.f32 %v81, %v1060
    %v1062 = vand.u32 %v1061, 4294901760
    %v1063 = vsub.f32 %v1061, %v1062
    %v1064 = vand.u32 %v1063, 4294901760
    %1065 = vmatpush1.msra.mxu0 %v1064
    %1066 = vmatprep.subr.mxu0 0.0
    %v1067 = vand.u32 %v82, 4294901760
    %v1068 = vsub.f32 %v82, %v1067
    %v1069 = vand.u32 %v1068, 4294901760
    %v1070 = vsub.f32 %v1068, %v1069
    %v1071 = vand.u32 %v1070, 4294901760
    %1072 = vmatpush1.msra.mxu0 %v1071
    %1073 = vmatprep.subr.mxu0 0.0
    %v1074 = vand.u32 %v83, 4294901760
    %v1075 = vsub.f32 %v83, %v1074
    %v1076 = vand.u32 %v1075, 4294901760
    %v1077 = vsub.f32 %v1075, %v1076
    %v1078 = vand.u32 %v1077, 4294901760
    %1079 = vmatpush1.msra.mxu0 %v1078
    %1080 = vmatprep.subr.mxu0 0.0
    %v1081 = vand.u32 %v84, 4294901760
    %v1082 = vsub.f32 %v84, %v1081
    %v1083 = vand.u32 %v1082, 4294901760
    %v1084 = vsub.f32 %v1082, %v1083
    %v1085 = vand.u32 %v1084, 4294901760
    %1086 = vmatpush1.msra.mxu0 %v1085
    %1087 = vmatprep.subr.mxu0 0.0
    %v1088 = vand.u32 %v85, 4294901760
    %v1089 = vsub.f32 %v85, %v1088
    %v1090 = vand.u32 %v1089, 4294901760
    %v1091 = vsub.f32 %v1089, %v1090
    %v1092 = vand.u32 %v1091, 4294901760
    %1093 = vmatpush1.msra.mxu0 %v1092
    %1094 = vmatprep.subr.mxu0 0.0
    %v1095 = vand.u32 %v86, 4294901760
    %v1096 = vsub.f32 %v86, %v1095
    %v1097 = vand.u32 %v1096, 4294901760
    %v1098 = vsub.f32 %v1096, %v1097
    %v1099 = vand.u32 %v1098, 4294901760
    %1100 = vmatpush1.msra.mxu0 %v1099
    %1101 = vmatprep.subr.mxu0 0.0
    %v1102 = vand.u32 %v87, 4294901760
    %v1103 = vsub.f32 %v87, %v1102
    %v1104 = vand.u32 %v1103, 4294901760
    %v1105 = vsub.f32 %v1103, %v1104
    %v1106 = vand.u32 %v1105, 4294901760
    %1107 = vmatpush1.msra.mxu0 %v1106
    %1108 = vmatprep.subr.mxu0 0.0
    %v1109 = vand.u32 %v88, 4294901760
    %v1110 = vsub.f32 %v88, %v1109
    %v1111 = vand.u32 %v1110, 4294901760
    %v1112 = vsub.f32 %v1110, %v1111
    %v1113 = vand.u32 %v1112, 4294901760
    %1114 = vmatpush1.msra.mxu0 %v1113
    %1115 = vmatprep.subr.mxu0 0.0
    %v1116 = vand.u32 %v89, 4294901760
    %v1117 = vsub.f32 %v89, %v1116
    %v1118 = vand.u32 %v1117, 4294901760
    %v1119 = vsub.f32 %v1117, %v1118
    %v1120 = vand.u32 %v1119, 4294901760
    %1121 = vmatpush1.msra.mxu0 %v1120
    %1122 = vmatprep.subr.mxu0 0.0
    %v1123 = vand.u32 %v90, 4294901760
    %v1124 = vsub.f32 %v90, %v1123
    %v1125 = vand.u32 %v1124, 4294901760
    %v1126 = vsub.f32 %v1124, %v1125
    %v1127 = vand.u32 %v1126, 4294901760
    %1128 = vmatpush1.msra.mxu0 %v1127
    %1129 = vmatprep.subr.mxu0 0.0
    %v1130 = vand.u32 %v91, 4294901760
    %v1131 = vsub.f32 %v91, %v1130
    %v1132 = vand.u32 %v1131, 4294901760
    %v1133 = vsub.f32 %v1131, %v1132
    %v1134 = vand.u32 %v1133, 4294901760
    %1135 = vmatpush1.msra.mxu0 %v1134
    %1136 = vmatprep.subr.mxu0 0.0
    %v1137 = vand.u32 %v92, 4294901760
    %v1138 = vsub.f32 %v92, %v1137
    %v1139 = vand.u32 %v1138, 4294901760
    %v1140 = vsub.f32 %v1138, %v1139
    %v1141 = vand.u32 %v1140, 4294901760
    %1142 = vmatpush1.msra.mxu0 %v1141
    %1143 = vmatprep.subr.mxu0 0.0
    %v1144 = vand.u32 %v93, 4294901760
    %v1145 = vsub.f32 %v93, %v1144
    %v1146 = vand.u32 %v1145, 4294901760
    %v1147 = vsub.f32 %v1145, %v1146
    %v1148 = vand.u32 %v1147, 4294901760
    %1149 = vmatpush1.msra.mxu0 %v1148
    %1150 = vmatprep.subr.mxu0 0.0
    %v1151 = vand.u32 %v94, 4294901760
    %v1152 = vsub.f32 %v94, %v1151
    %v1153 = vand.u32 %v1152, 4294901760
    %v1154 = vsub.f32 %v1152, %v1153
    %v1155 = vand.u32 %v1154, 4294901760
    %1156 = vmatpush1.msra.mxu0 %v1155
    %1157 = vmatprep.subr.mxu0 0.0
    %v1158 = vand.u32 %v95, 4294901760
    %v1159 = vsub.f32 %v95, %v1158
    %v1160 = vand.u32 %v1159, 4294901760
    %v1161 = vsub.f32 %v1159, %v1160
    %v1162 = vand.u32 %v1161, 4294901760
    %1163 = vmatpush1.msra.mxu0 %v1162
    %1164 = vmatprep.subr.mxu0 0.0
    %1165 = vmatpush1.msra.mxu0 0.0
    %1166 = vmatprep.subr.mxu0 0.0
    %1167 = vmatpush1.msra.mxu0 0.0
    %1168 = vmatprep.subr.mxu0 0.0
    %1169 = vmatpush1.msra.mxu0 0.0
    %1170 = vmatprep.subr.mxu0 0.0
    %1171 = vmatpush1.msra.mxu0 0.0
    %1172 = vmatprep.subr.mxu0 0.0
    %1173 = vmatpush1.msra.mxu0 0.0
    %1174 = vmatprep.subr.mxu0 0.0
    %1175 = vmatpush1.msra.mxu0 0.0
    %1176 = vmatprep.subr.mxu0 0.0
    %1177 = vmatpush1.msra.mxu0 0.0
    %1178 = vmatprep.subr.mxu0 0.0
    %1179 = vmatpush1.msra.mxu0 0.0
    %1180 = vmatprep.subr.mxu0 0.0
    %1181 = vmatpush1.msra.mxu0 0.0
    %1182 = vmatprep.subr.mxu0 0.0
    %1183 = vmatpush1.msra.mxu0 0.0
    %1184 = vmatprep.subr.mxu0 0.0
    %1185 = vmatpush1.msra.mxu0 0.0
    %1186 = vmatprep.subr.mxu0 0.0
    %1187 = vmatpush1.msra.mxu0 0.0
    %1188 = vmatprep.subr.mxu0 0.0
    %1189 = vmatpush1.msra.mxu0 0.0
    %1190 = vmatprep.subr.mxu0 0.0
    %1191 = vmatpush1.msra.mxu0 0.0
    %1192 = vmatprep.subr.mxu0 0.0
    %1193 = vmatpush1.msra.mxu0 0.0
    %1194 = vmatprep.subr.mxu0 0.0
    %1195 = vmatpush1.msra.mxu0 0.0
    %1196 = vmatprep.mubr.f32.mxu0 0.0
    %v1197 = vand.u32 %v47, 4294901760
    %1198 = vmatmul.mubr.f32.gmra.mrb[0].mxu0 %v1197
    %v1199 = vpop.f32.mrb[0].mxu0
    %v1200 = vadd.f32 %v1049, %v1199
    %v1201 = vpop.f32.mrb[0].mxu0
    %1202 = vdwg.mxu0
    %1203 = vmatprep.subr.mxu0 0.0
    %v1204 = vand.u32 %v80, 4294901760
    %v1205 = vsub.f32 %v80, %v1204
    %1206 = vmatpush1.msra.mxu0 %v1205
    %1207 = vmatprep.subr.mxu0 0.0
    %v1208 = vand.u32 %v81, 4294901760
    %v1209 = vsub.f32 %v81, %v1208
    %1210 = vmatpush1.msra.mxu0 %v1209
    %1211 = vmatprep.subr.mxu0 0.0
    %v1212 = vand.u32 %v82, 4294901760
    %v1213 = vsub.f32 %v82, %v1212
    %1214 = vmatpush1.msra.mxu0 %v1213
    %1215 = vmatprep.subr.mxu0 0.0
    %v1216 = vand.u32 %v83, 4294901760
    %v1217 = vsub.f32 %v83, %v1216
    %1218 = vmatpush1.msra.mxu0 %v1217
    %1219 = vmatprep.subr.mxu0 0.0
    %v1220 = vand.u32 %v84, 4294901760
    %v1221 = vsub.f32 %v84, %v1220
    %1222 = vmatpush1.msra.mxu0 %v1221
    %1223 = vmatprep.subr.mxu0 0.0
    %v1224 = vand.u32 %v85, 4294901760
    %v1225 = vsub.f32 %v85, %v1224
    %1226 = vmatpush1.msra.mxu0 %v1225
    %1227 = vmatprep.subr.mxu0 0.0
    %v1228 = vand.u32 %v86, 4294901760
    %v1229 = vsub.f32 %v86, %v1228
    %1230 = vmatpush1.msra.mxu0 %v1229
    %1231 = vmatprep.subr.mxu0 0.0
    %v1232 = vand.u32 %v87, 4294901760
    %v1233 = vsub.f32 %v87, %v1232
    %1234 = vmatpush1.msra.mxu0 %v1233
    %1235 = vmatprep.subr.mxu0 0.0
    %v1236 = vand.u32 %v88, 4294901760
    %v1237 = vsub.f32 %v88, %v1236
    %1238 = vmatpush1.msra.mxu0 %v1237
    %1239 = vmatprep.subr.mxu0 0.0
    %v1240 = vand.u32 %v89, 4294901760
    %v1241 = vsub.f32 %v89, %v1240
    %1242 = vmatpush1.msra.mxu0 %v1241
    %1243 = vmatprep.subr.mxu0 0.0
    %v1244 = vand.u32 %v90, 4294901760
    %v1245 = vsub.f32 %v90, %v1244
    %1246 = vmatpush1.msra.mxu0 %v1245
    %1247 = vmatprep.subr.mxu0 0.0
    %v1248 = vand.u32 %v91, 4294901760
    %v1249 = vsub.f32 %v91, %v1248
    %1250 = vmatpush1.msra.mxu0 %v1249
    %1251 = vmatprep.subr.mxu0 0.0
    %v1252 = vand.u32 %v92, 4294901760
    %v1253 = vsub.f32 %v92, %v1252
    %1254 = vmatpush1.msra.mxu0 %v1253
    %1255 = vmatprep.subr.mxu0 0.0
    %v1256 = vand.u32 %v93, 4294901760
    %v1257 = vsub.f32 %v93, %v1256
    %1258 = vmatpush1.msra.mxu0 %v1257
    %1259 = vmatprep.subr.mxu0 0.0
    %v1260 = vand.u32 %v94, 4294901760
    %v1261 = vsub.f32 %v94, %v1260
    %1262 = vmatpush1.msra.mxu0 %v1261
    %1263 = vmatprep.subr.mxu0 0.0
    %v1264 = vand.u32 %v95, 4294901760
    %v1265 = vsub.f32 %v95, %v1264
    %1266 = vmatpush1.msra.mxu0 %v1265
    %1267 = vmatprep.subr.mxu0 0.0
    %1268 = vmatpush1.msra.mxu0 0.0
    %1269 = vmatprep.subr.mxu0 0.0
    %1270 = vmatpush1.msra.mxu0 0.0
    %1271 = vmatprep.subr.mxu0 0.0
    %1272 = vmatpush1.msra.mxu0 0.0
    %1273 = vmatprep.subr.mxu0 0.0
    %1274 = vmatpush1.msra.mxu0 0.0
    %1275 = vmatprep.subr.mxu0 0.0
    %1276 = vmatpush1.msra.mxu0 0.0
    %1277 = vmatprep.subr.mxu0 0.0
    %1278 = vmatpush1.msra.mxu0 0.0
    %1279 = vmatprep.subr.mxu0 0.0
    %1280 = vmatpush1.msra.mxu0 0.0
    %1281 = vmatprep.subr.mxu0 0.0
    %1282 = vmatpush1.msra.mxu0 0.0
    %1283 = vmatprep.subr.mxu0 0.0
    %1284 = vmatpush1.msra.mxu0 0.0
    %1285 = vmatprep.subr.mxu0 0.0
    %1286 = vmatpush1.msra.mxu0 0.0
    %1287 = vmatprep.subr.mxu0 0.0
    %1288 = vmatpush1.msra.mxu0 0.0
    %1289 = vmatprep.subr.mxu0 0.0
    %1290 = vmatpush1.msra.mxu0 0.0
    %1291 = vmatprep.subr.mxu0 0.0
    %1292 = vmatpush1.msra.mxu0 0.0
    %1293 = vmatprep.subr.mxu0 0.0
    %1294 = vmatpush1.msra.mxu0 0.0
    %1295 = vmatprep.subr.mxu0 0.0
    %1296 = vmatpush1.msra.mxu0 0.0
    %1297 = vmatprep.subr.mxu0 0.0
    %1298 = vmatpush1.msra.mxu0 0.0
    %1299 = vmatprep.mubr.f32.mxu0 0.0
    %v1300 = vand.u32 %v47, 4294901760
    %v1301 = vsub.f32 %v47, %v1300
    %1302 = vmatmul.mubr.f32.gmra.mrb[0].mxu0 %v1301
    %v1303 = vpop.f32.mrb[0].mxu0
    %v1304 = vadd.f32 %v1200, %v1303
    %v1305 = vpop.f32.mrb[0].mxu0
    %1306 = vdwg.mxu0
    %1307 = vmatprep.subr.mxu0 0.0
    %v1308 = vand.u32 %v80, 4294901760
    %1309 = vmatpush1.msra.mxu0 %v1308
    %1310 = vmatprep.subr.mxu0 0.0
    %v1311 = vand.u32 %v81, 4294901760
    %1312 = vmatpush1.msra.mxu0 %v1311
    %1313 = vmatprep.subr.mxu0 0.0
    %v1314 = vand.u32 %v82, 4294901760
    %1315 = vmatpush1.msra.mxu0 %v1314
    %1316 = vmatprep.subr.mxu0 0.0
    %v1317 = vand.u32 %v83, 4294901760
    %1318 = vmatpush1.msra.mxu0 %v1317
    %1319 = vmatprep.subr.mxu0 0.0
    %v1320 = vand.u32 %v84, 4294901760
    %1321 = vmatpush1.msra.mxu0 %v1320
    %1322 = vmatprep.subr.mxu0 0.0
    %v1323 = vand.u32 %v85, 4294901760
    %1324 = vmatpush1.msra.mxu0 %v1323
    %1325 = vmatprep.subr.mxu0 0.0
    %v1326 = vand.u32 %v86, 4294901760
    %1327 = vmatpush1.msra.mxu0 %v1326
    %1328 = vmatprep.subr.mxu0 0.0
    %v1329 = vand.u32 %v87, 4294901760
    %1330 = vmatpush1.msra.mxu0 %v1329
    %1331 = vmatprep.subr.mxu0 0.0
    %v1332 = vand.u32 %v88, 4294901760
    %1333 = vmatpush1.msra.mxu0 %v1332
    %1334 = vmatprep.subr.mxu0 0.0
    %v1335 = vand.u32 %v89, 4294901760
    %1336 = vmatpush1.msra.mxu0 %v1335
    %1337 = vmatprep.subr.mxu0 0.0
    %v1338 = vand.u32 %v90, 4294901760
    %1339 = vmatpush1.msra.mxu0 %v1338
    %1340 = vmatprep.subr.mxu0 0.0
    %v1341 = vand.u32 %v91, 4294901760
    %1342 = vmatpush1.msra.mxu0 %v1341
    %1343 = vmatprep.subr.mxu0 0.0
    %v1344 = vand.u32 %v92, 4294901760
    %1345 = vmatpush1.msra.mxu0 %v1344
    %1346 = vmatprep.subr.mxu0 0.0
    %v1347 = vand.u32 %v93, 4294901760
    %1348 = vmatpush1.msra.mxu0 %v1347
    %1349 = vmatprep.subr.mxu0 0.0
    %v1350 = vand.u32 %v94, 4294901760
    %1351 = vmatpush1.msra.mxu0 %v1350
    %1352 = vmatprep.subr.mxu0 0.0
    %v1353 = vand.u32 %v95, 4294901760
    %1354 = vmatpush1.msra.mxu0 %v1353
    %1355 = vmatprep.subr.mxu0 0.0
    %1356 = vmatpush1.msra.mxu0 0.0
    %1357 = vmatprep.subr.mxu0 0.0
    %1358 = vmatpush1.msra.mxu0 0.0
    %1359 = vmatprep.subr.mxu0 0.0
    %1360 = vmatpush1.msra.mxu0 0.0
    %1361 = vmatprep.subr.mxu0 0.0
    %1362 = vmatpush1.msra.mxu0 0.0
    %1363 = vmatprep.subr.mxu0 0.0
    %1364 = vmatpush1.msra.mxu0 0.0
    %1365 = vmatprep.subr.mxu0 0.0
    %1366 = vmatpush1.msra.mxu0 0.0
    %1367 = vmatprep.subr.mxu0 0.0
    %1368 = vmatpush1.msra.mxu0 0.0
    %1369 = vmatprep.subr.mxu0 0.0
    %1370 = vmatpush1.msra.mxu0 0.0
    %1371 = vmatprep.subr.mxu0 0.0
    %1372 = vmatpush1.msra.mxu0 0.0
    %1373 = vmatprep.subr.mxu0 0.0
    %1374 = vmatpush1.msra.mxu0 0.0
    %1375 = vmatprep.subr.mxu0 0.0
    %1376 = vmatpush1.msra.mxu0 0.0
    %1377 = vmatprep.subr.mxu0 0.0
    %1378 = vmatpush1.msra.mxu0 0.0
    %1379 = vmatprep.subr.mxu0 0.0
    %1380 = vmatpush1.msra.mxu0 0.0
    %1381 = vmatprep.subr.mxu0 0.0
    %1382 = vmatpush1.msra.mxu0 0.0
    %1383 = vmatprep.subr.mxu0 0.0
    %1384 = vmatpush1.msra.mxu0 0.0
    %1385 = vmatprep.subr.mxu0 0.0
    %1386 = vmatpush1.msra.mxu0 0.0
    %1387 = vmatprep.mubr.f32.mxu0 0.0
    %v1388 = vand.u32 %v47, 4294901760
    %v1389 = vsub.f32 %v47, %v1388
    %v1390 = vand.u32 %v1389, 4294901760
    %1391 = vmatmul.mubr.f32.gmra.mrb[0].mxu0 %v1390
    %v1392 = vpop.f32.mrb[0].mxu0
    %v1393 = vadd.f32 %v1304, %v1392
    %v1394 = vpop.f32.mrb[0].mxu0
    %1395 = vdwg.mxu0
    %1396 = vmatprep.subr.mxu0 0.0
    %v1397 = vand.u32 %v80, 4294901760
    %v1398 = vsub.f32 %v80, %v1397
    %v1399 = vand.u32 %v1398, 4294901760
    %1400 = vmatpush1.msra.mxu0 %v1399
    %1401 = vmatprep.subr.mxu0 0.0
    %v1402 = vand.u32 %v81, 4294901760
    %v1403 = vsub.f32 %v81, %v1402
    %v1404 = vand.u32 %v1403, 4294901760
    %1405 = vmatpush1.msra.mxu0 %v1404
    %1406 = vmatprep.subr.mxu0 0.0
    %v1407 = vand.u32 %v82, 4294901760
    %v1408 = vsub.f32 %v82, %v1407
    %v1409 = vand.u32 %v1408, 4294901760
    %1410 = vmatpush1.msra.mxu0 %v1409
    %1411 = vmatprep.subr.mxu0 0.0
    %v1412 = vand.u32 %v83, 4294901760
    %v1413 = vsub.f32 %v83, %v1412
    %v1414 = vand.u32 %v1413, 4294901760
    %1415 = vmatpush1.msra.mxu0 %v1414
    %1416 = vmatprep.subr.mxu0 0.0
    %v1417 = vand.u32 %v84, 4294901760
    %v1418 = vsub.f32 %v84, %v1417
    %v1419 = vand.u32 %v1418, 4294901760
    %1420 = vmatpush1.msra.mxu0 %v1419
    %1421 = vmatprep.subr.mxu0 0.0
    %v1422 = vand.u32 %v85, 4294901760
    %v1423 = vsub.f32 %v85, %v1422
    %v1424 = vand.u32 %v1423, 4294901760
    %1425 = vmatpush1.msra.mxu0 %v1424
    %1426 = vmatprep.subr.mxu0 0.0
    %v1427 = vand.u32 %v86, 4294901760
    %v1428 = vsub.f32 %v86, %v1427
    %v1429 = vand.u32 %v1428, 4294901760
    %1430 = vmatpush1.msra.mxu0 %v1429
    %1431 = vmatprep.subr.mxu0 0.0
    %v1432 = vand.u32 %v87, 4294901760
    %v1433 = vsub.f32 %v87, %v1432
    %v1434 = vand.u32 %v1433, 4294901760
    %1435 = vmatpush1.msra.mxu0 %v1434
    %1436 = vmatprep.subr.mxu0 0.0
    %v1437 = vand.u32 %v88, 4294901760
    %v1438 = vsub.f32 %v88, %v1437
    %v1439 = vand.u32 %v1438, 4294901760
    %1440 = vmatpush1.msra.mxu0 %v1439
    %1441 = vmatprep.subr.mxu0 0.0
    %v1442 = vand.u32 %v89, 4294901760
    %v1443 = vsub.f32 %v89, %v1442
    %v1444 = vand.u32 %v1443, 4294901760
    %1445 = vmatpush1.msra.mxu0 %v1444
    %1446 = vmatprep.subr.mxu0 0.0
    %v1447 = vand.u32 %v90, 4294901760
    %v1448 = vsub.f32 %v90, %v1447
    %v1449 = vand.u32 %v1448, 4294901760
    %1450 = vmatpush1.msra.mxu0 %v1449
    %1451 = vmatprep.subr.mxu0 0.0
    %v1452 = vand.u32 %v91, 4294901760
    %v1453 = vsub.f32 %v91, %v1452
    %v1454 = vand.u32 %v1453, 4294901760
    %1455 = vmatpush1.msra.mxu0 %v1454
    %1456 = vmatprep.subr.mxu0 0.0
    %v1457 = vand.u32 %v92, 4294901760
    %v1458 = vsub.f32 %v92, %v1457
    %v1459 = vand.u32 %v1458, 4294901760
    %1460 = vmatpush1.msra.mxu0 %v1459
    %1461 = vmatprep.subr.mxu0 0.0
    %v1462 = vand.u32 %v93, 4294901760
    %v1463 = vsub.f32 %v93, %v1462
    %v1464 = vand.u32 %v1463, 4294901760
    %1465 = vmatpush1.msra.mxu0 %v1464
    %1466 = vmatprep.subr.mxu0 0.0
    %v1467 = vand.u32 %v94, 4294901760
    %v1468 = vsub.f32 %v94, %v1467
    %v1469 = vand.u32 %v1468, 4294901760
    %1470 = vmatpush1.msra.mxu0 %v1469
    %1471 = vmatprep.subr.mxu0 0.0
    %v1472 = vand.u32 %v95, 4294901760
    %v1473 = vsub.f32 %v95, %v1472
    %v1474 = vand.u32 %v1473, 4294901760
    %1475 = vmatpush1.msra.mxu0 %v1474
    %1476 = vmatprep.subr.mxu0 0.0
    %1477 = vmatpush1.msra.mxu0 0.0
    %1478 = vmatprep.subr.mxu0 0.0
    %1479 = vmatpush1.msra.mxu0 0.0
    %1480 = vmatprep.subr.mxu0 0.0
    %1481 = vmatpush1.msra.mxu0 0.0
    %1482 = vmatprep.subr.mxu0 0.0
    %1483 = vmatpush1.msra.mxu0 0.0
    %1484 = vmatprep.subr.mxu0 0.0
    %1485 = vmatpush1.msra.mxu0 0.0
    %1486 = vmatprep.subr.mxu0 0.0
    %1487 = vmatpush1.msra.mxu0 0.0
    %1488 = vmatprep.subr.mxu0 0.0
    %1489 = vmatpush1.msra.mxu0 0.0
    %1490 = vmatprep.subr.mxu0 0.0
    %1491 = vmatpush1.msra.mxu0 0.0
    %1492 = vmatprep.subr.mxu0 0.0
    %1493 = vmatpush1.msra.mxu0 0.0
    %1494 = vmatprep.subr.mxu0 0.0
    %1495 = vmatpush1.msra.mxu0 0.0
    %1496 = vmatprep.subr.mxu0 0.0
    %1497 = vmatpush1.msra.mxu0 0.0
    %1498 = vmatprep.subr.mxu0 0.0
    %1499 = vmatpush1.msra.mxu0 0.0
    %1500 = vmatprep.subr.mxu0 0.0
    %1501 = vmatpush1.msra.mxu0 0.0
    %1502 = vmatprep.subr.mxu0 0.0
    %1503 = vmatpush1.msra.mxu0 0.0
    %1504 = vmatprep.subr.mxu0 0.0
    %1505 = vmatpush1.msra.mxu0 0.0
    %1506 = vmatprep.subr.mxu0 0.0
    %1507 = vmatpush1.msra.mxu0 0.0
    %1508 = vmatprep.mubr.f32.mxu0 0.0
    %v1509 = vand.u32 %v47, 4294901760
    %1510 = vmatmul.mubr.f32.gmra.mrb[0].mxu0 %v1509
    %v1511 = vpop.f32.mrb[0].mxu0
    %v1512 = vadd.f32 %v1393, %v1511
    %v1513 = vpop.f32.mrb[0].mxu0
    %1514 = vdwg.mxu0
    %1515 = vmatprep.subr.mxu0 0.0
    %v1516 = vand.u32 %v80, 4294901760
    %1517 = vmatpush1.msra.mxu0 %v1516
    %1518 = vmatprep.subr.mxu0 0.0
    %v1519 = vand.u32 %v81, 4294901760
    %1520 = vmatpush1.msra.mxu0 %v1519
    %1521 = vmatprep.subr.mxu0 0.0
    %v1522 = vand.u32 %v82, 4294901760
    %1523 = vmatpush1.msra.mxu0 %v1522
    %1524 = vmatprep.subr.mxu0 0.0
    %v1525 = vand.u32 %v83, 4294901760
    %1526 = vmatpush1.msra.mxu0 %v1525
    %1527 = vmatprep.subr.mxu0 0.0
    %v1528 = vand.u32 %v84, 4294901760
    %1529 = vmatpush1.msra.mxu0 %v1528
    %1530 = vmatprep.subr.mxu0 0.0
    %v1531 = vand.u32 %v85, 4294901760
    %1532 = vmatpush1.msra.mxu0 %v1531
    %1533 = vmatprep.subr.mxu0 0.0
    %v1534 = vand.u32 %v86, 4294901760
    %1535 = vmatpush1.msra.mxu0 %v1534
    %1536 = vmatprep.subr.mxu0 0.0
    %v1537 = vand.u32 %v87, 4294901760
    %1538 = vmatpush1.msra.mxu0 %v1537
    %1539 = vmatprep.subr.mxu0 0.0
    %v1540 = vand.u32 %v88, 4294901760
    %1541 = vmatpush1.msra.mxu0 %v1540
    %1542 = vmatprep.subr.mxu0 0.0
    %v1543 = vand.u32 %v89, 4294901760
    %1544 = vmatpush1.msra.mxu0 %v1543
    %1545 = vmatprep.subr.mxu0 0.0
    %v1546 = vand.u32 %v90, 4294901760
    %1547 = vmatpush1.msra.mxu0 %v1546
    %1548 = vmatprep.subr.mxu0 0.0
    %v1549 = vand.u32 %v91, 4294901760
    %1550 = vmatpush1.msra.mxu0 %v1549
    %1551 = vmatprep.subr.mxu0 0.0
    %v1552 = vand.u32 %v92, 4294901760
    %1553 = vmatpush1.msra.mxu0 %v1552
    %1554 = vmatprep.subr.mxu0 0.0
    %v1555 = vand.u32 %v93, 4294901760
    %1556 = vmatpush1.msra.mxu0 %v1555
    %1557 = vmatprep.subr.mxu0 0.0
    %v1558 = vand.u32 %v94, 4294901760
    %1559 = vmatpush1.msra.mxu0 %v1558
    %1560 = vmatprep.subr.mxu0 0.0
    %v1561 = vand.u32 %v95, 4294901760
    %1562 = vmatpush1.msra.mxu0 %v1561
    %1563 = vmatprep.subr.mxu0 0.0
    %1564 = vmatpush1.msra.mxu0 0.0
    %1565 = vmatprep.subr.mxu0 0.0
    %1566 = vmatpush1.msra.mxu0 0.0
    %1567 = vmatprep.subr.mxu0 0.0
    %1568 = vmatpush1.msra.mxu0 0.0
    %1569 = vmatprep.subr.mxu0 0.0
    %1570 = vmatpush1.msra.mxu0 0.0
    %1571 = vmatprep.subr.mxu0 0.0
    %1572 = vmatpush1.msra.mxu0 0.0
    %1573 = vmatprep.subr.mxu0 0.0
    %1574 = vmatpush1.msra.mxu0 0.0
    %1575 = vmatprep.subr.mxu0 0.0
    %1576 = vmatpush1.msra.mxu0 0.0
    %1577 = vmatprep.subr.mxu0 0.0
    %1578 = vmatpush1.msra.mxu0 0.0
    %1579 = vmatprep.subr.mxu0 0.0
    %1580 = vmatpush1.msra.mxu0 0.0
    %1581 = vmatprep.subr.mxu0 0.0
    %1582 = vmatpush1.msra.mxu0 0.0
    %1583 = vmatprep.subr.mxu0 0.0
    %1584 = vmatpush1.msra.mxu0 0.0
    %1585 = vmatprep.subr.mxu0 0.0
    %1586 = vmatpush1.msra.mxu0 0.0
    %1587 = vmatprep.subr.mxu0 0.0
    %1588 = vmatpush1.msra.mxu0 0.0
    %1589 = vmatprep.subr.mxu0 0.0
    %1590 = vmatpush1.msra.mxu0 0.0
    %1591 = vmatprep.subr.mxu0 0.0
    %1592 = vmatpush1.msra.mxu0 0.0
    %1593 = vmatprep.subr.mxu0 0.0
    %1594 = vmatpush1.msra.mxu0 0.0
    %1595 = vmatprep.mubr.f32.mxu0 0.0
    %v1596 = vand.u32 %v47, 4294901760
    %1597 = vmatmul.mubr.f32.gmra.mrb[0].mxu0 %v1596
    %v1598 = vpop.f32.mrb[0].mxu0
    %v1599 = vadd.f32 %v1512, %v1598
    %v1600 = vpop.f32.mrb[0].mxu0
    %1601 = vdwg.mxu0
    %s1602 = sld [smem:[#allocation2]]
    %s1603 = ssub.f32 0.0, %s1602
    %v1604 = vstv %s1603
    %vm1605 = vcmp.gt.f32.partialorder %v1599, %v1604
    %v1606 = vsel %vm1605, 1, 0
    %v1607 = vcvt.s32.f32 %v1606
    %1608 = vst [vmem:[#allocation8] sm:$0xf] %v1607
    // Predicated region
    $region22: #{tpu_custom_call.1} parent=1 // pred_check
      _
    $region23: #{tpu_custom_call.1} parent=1 // pred_check_branch
      %1610 = sbr.rel (0) target = $region25
    $region24: #{tpu_custom_call.1} parent=1 // pred_region
      %s1612 = ssub.s32 64, 64
      %1613 = vsyncadd [#allocation5], %s1612
      %s1615 = sshll.u32 [#allocation8], 4
      %s1616 = int_to_ptr.vmem [resolvable:$true] %s1615
      %1618 = dma.vmem_to_hbm [thread:$0]  %s1616, 64, %s3, [#allocation5]
    $region25: #{tpu_custom_call.1} parent=1 // pred_fallthru
      _
    // Predicated region
    $region26: #{tpu_custom_call.1} parent=1 // pred_check
      _
    $region27: #{tpu_custom_call.1} parent=1 // pred_check_branch
      %1620 = sbr.rel (0) target = $region29
    $region28: #{tpu_custom_call.1} parent=1 // pred_region
      %1621 = dma.done [#allocation5], 64
    $region29: #{tpu_custom_call.1} parent=1 // pred_fallthru
      _
    %1622 = vsyncpa [#allocation4], 1
    %1623 = vsyncpa [#allocation7], 1
    %1624 = vsyncpa [#allocation5], 1

</llo_original>
